<compile_context>
chip_gen: v7x
topology: tpu7x:2x2x1
jax: 0.10.0
libtpu: 0.0.40
codegen_flags: <defaults>
</compile_context>

<pallas_src>
import jax
import jax.numpy as jnp
import numpy as np
from jax import lax
from jax.experimental import pallas as pl
from jax.experimental.pallas import tpu as pltpu

NUM_CONV_LAYERS = 10
CONV_K = 3
TCONV_K = 4
NEG_SLOPE = 0.2


def _leaky(x):
    return jnp.where(x > 0, x, NEG_SLOPE * x)


def make_convblock_kernel(C, Lb, num_layers, compute_dtype):
    def kernel(x_ref, wc_ref, wt_ref, ml_ref, mr_ref, o_ref, xcat_ref):
        # x_ref:  (C, Lb)              activation slab (Lb = Bblk * L lanes)
        # wc_ref: (num_layers, C, 3C)  fused conv weights, taps on the 3C axis
        # wt_ref: (2C, 3C)             fused transposed-conv weights (even/odd rows)
        # ml_ref/mr_ref: (C, Lb)       0/1 masks: position has a valid left/right neighbour
        # o_ref:  (2C, Lb)             rows 0:C = even output samples, C:2C = odd
        # xcat_ref: (3C, Lb) VMEM scratch holding [x(j-1); x(j); x(j+1)]
        x = x_ref[...]
        ml = ml_ref[...]
        mr = mr_ref[...]

        def fill_xcat(a):
            # Shifted copies via XLU rolls; boundary masks zero the samples that
            # would leak across batch-segment edges ('same' zero padding).
            xcat_ref[0:C, :] = pltpu.roll(a, 1, axis=1) * ml            # a[:, j-1]
            xcat_ref[C:2 * C, :] = a                                    # a[:, j]
            xcat_ref[2 * C:3 * C, :] = pltpu.roll(a, Lb - 1, axis=1) * mr  # a[:, j+1]

        # 10 x (Conv1d k=3 'same', no bias) + LeakyReLU(0.2), one fused matmul each.
        for i in range(num_layers):
            fill_xcat(x)
            y = jnp.dot(wc_ref[i], xcat_ref[...],
                        preferred_element_type=jnp.float32)
            x = _leaky(y).astype(compute_dtype)

        # ConvTranspose1d(k=4, s=2, p=1, no bias) + LeakyReLU(0.2):
        # one (2C, 3C) @ (3C, Lb) matmul; wrapper interleaves even/odd rows.
        fill_xcat(x)
        y = jnp.dot(wt_ref[...], xcat_ref[...],
                    preferred_element_type=jnp.float32)
        o_ref[...] = _leaky(y).astype(o_ref.dtype)

    return kernel


def _choose_bblk(B, L):
    """Pick a batch block so the lane width (bblk*L) is a multiple of 128."""
    best = None
    for bb in range(1, B + 1):
        if B % bb == 0 and (bb * L) % 128 == 0:
            if best is None or bb * L <= 4096:
                best = bb
    return best if best is not None else B  # fallback: whole array as one block


def conv_block_forward(x, w_conv, w_tconv, *, compute_dtype=jnp.float32):
    """x: (B, C, L) f32; w_conv: (layers, C, C, 3); w_tconv: (C, C, 4)."""
    B, C, L = x.shape
    num_layers, _, _, K = w_conv.shape
    assert K == CONV_K and w_tconv.shape[-1] == TCONV_K

    bblk = _choose_bblk(B, L)
    Lb = bblk * L
    grid = (B // bblk,)

    # ---- host/XLA-side layout plumbing (free relative to the kernel) ----
    # Activations: (B, C, L) -> (C, B*L)  (batch packed into lanes).
    x2d = x.transpose(1, 0, 2).reshape(C, B * L).astype(compute_dtype)
    # Conv weights: (layers, Cout, Cin, K) -> (layers, Cout, K*Cin), tap-major to
    # match xcat rows [x(j-1); x(j); x(j+1)].
    wc = (w_conv.transpose(0, 1, 3, 2)
          .reshape(num_layers, C, K * C).astype(compute_dtype))
    # Transposed-conv weights (Cin, Cout, 4) -> (2C, 3C):
    #   even: out[co,2m]   = sum_ci x[ci,m-1]*W[ci,co,3] + x[ci,m]*W[ci,co,1]
    #   odd : out[co,2m+1] = sum_ci x[ci,m]*W[ci,co,2]   + x[ci,m+1]*W[ci,co,0]
    z = jnp.zeros((C, C), w_tconv.dtype)
    wt_even = jnp.concatenate([w_tconv[:, :, 3].T, w_tconv[:, :, 1].T, z], axis=1)
    wt_odd = jnp.concatenate([z, w_tconv[:, :, 2].T, w_tconv[:, :, 0].T], axis=1)
    wt = jnp.concatenate([wt_even, wt_odd], axis=0).astype(compute_dtype)  # (2C, 3C)

    # Boundary masks (grid-invariant, per-segment periodic) as resident inputs.
    pos = jnp.arange(Lb, dtype=jnp.int32) % L
    mask_left = jnp.broadcast_to(pos != 0, (C, Lb)).astype(compute_dtype)
    mask_right = jnp.broadcast_to(pos != (L - 1), (C, Lb)).astype(compute_dtype)

    kernel = make_convblock_kernel(C, Lb, num_layers, compute_dtype)
    out2d = pl.pallas_call(
        kernel,
        out_shape=jax.ShapeDtypeStruct((2 * C, B * L), jnp.float32),
        grid=grid,
        in_specs=[
            pl.BlockSpec((C, Lb), lambda b: (0, b)),                   # activations
            pl.BlockSpec((num_layers, C, K * C), lambda b: (0, 0, 0)),  # conv weights
            pl.BlockSpec((2 * C, K * C), lambda b: (0, 0)),             # tconv weights
            pl.BlockSpec((C, Lb), lambda b: (0, 0)),                    # left mask
            pl.BlockSpec((C, Lb), lambda b: (0, 0)),                    # right mask
        ],
        out_specs=pl.BlockSpec((2 * C, Lb), lambda b: (0, b)),
        scratch_shapes=[pltpu.VMEM((K * C, Lb), compute_dtype)],
        compiler_params=pltpu.CompilerParams(dimension_semantics=("parallel",)),
    )(x2d, wc, wt, mask_left, mask_right)

    # Interleave even/odd samples + restore (B, C, 2L): pure reshape/transpose.
    out = out2d.reshape(2, C, B, L).transpose(2, 1, 3, 0).reshape(B, C, 2 * L)
    return out


def reference_forward(x, w_conv, w_tconv):
    """Pure-JAX reference matching PyTorch semantics."""
    y = x
    for i in range(w_conv.shape[0]):
        y = lax.conv_general_dilated(
            y, w_conv[i], window_strides=(1,), padding='SAME',
            dimension_numbers=('NCH', 'OIH', 'NCH'))
        y = jnp.where(y > 0, y, NEG_SLOPE * y)
    # ConvTranspose1d(k=4, s=2, p=1) == lhs-dilated correlation with flipped kernel,
    # padding k-1-p = 2 each side, weight interpreted as (in, out, k) -> 'IOH'.
    y = lax.conv_general_dilated(
        y, w_tconv[:, :, ::-1], window_strides=(1,), padding=[(2, 2)],
        lhs_dilation=(2,), dimension_numbers=('NCH', 'IOH', 'NCH'))
    y = jnp.where(y > 0, y, NEG_SLOPE * y)
    return y


if __name__ == "__main__":
    # Small shapes consistent with the module (channels kept sublane-aligned,
    # B*L chosen so the flattened lane dimension is a full 128-lane vreg width).
    B, C, L = 2, 8, 64
    key = jax.random.PRNGKey(0)
    kx, kw, kt = jax.random.split(key, 3)

    x = jax.random.normal(kx, (B, C, L), dtype=jnp.float32)
    w_conv = jax.random.normal(
        kw, (NUM_CONV_LAYERS, C, C, CONV_K), dtype=jnp.float32) / np.sqrt(C * CONV_K)
    w_tconv = jax.random.normal(
        kt, (C, C, TCONV_K), dtype=jnp.float32) / np.sqrt(C * TCONV_K)

    out = jax.block_until_ready(conv_block_forward(x, w_conv, w_tconv))

    ref = reference_forward(x, w_conv, w_tconv)
    np.testing.assert_allclose(np.asarray(out), np.asarray(ref), rtol=5e-4, atol=5e-4)

    print("KERNEL_OK")
</pallas_src>

<mosaic_0001>
module attributes {stable_mosaic.version = 11 : i64} {
  func.func @kernel(%arg0: i32, %arg1: memref<8x128xf32, #tpu.memory_space<vmem>>, %arg2: memref<10x8x24xf32, #tpu.memory_space<vmem>>, %arg3: memref<16x24xf32, #tpu.memory_space<vmem>>, %arg4: memref<8x128xf32, #tpu.memory_space<vmem>>, %arg5: memref<8x128xf32, #tpu.memory_space<vmem>>, %arg6: memref<16x128xf32, #tpu.memory_space<vmem>>, %arg7: memref<24x128xf32, #tpu.memory_space<vmem>>) attributes {dimension_semantics = [#tpu.dimension_semantics<parallel>], iteration_bounds = array<i64: 1>, scalar_prefetch = 0 : i64, scratch_operands = 1 : i64, tpu.core_type = #tpu.core_type<tc>, window_params = [{transform_indices = @transform_0, window_bounds = array<i64: 8, 128>}, {pipeline_mode = #tpu.pipeline_mode<synchronous>, transform_indices = @transform_1, window_bounds = array<i64: 10, 8, 24>}, {pipeline_mode = #tpu.pipeline_mode<synchronous>, transform_indices = @transform_2, window_bounds = array<i64: 16, 24>}, {pipeline_mode = #tpu.pipeline_mode<synchronous>, transform_indices = @transform_3, window_bounds = array<i64: 8, 128>}, {pipeline_mode = #tpu.pipeline_mode<synchronous>, transform_indices = @transform_4, window_bounds = array<i64: 8, 128>}, {transform_indices = @transform_5, window_bounds = array<i64: 16, 128>}]} {
    %c0 = arith.constant 0 : index
    %c0_0 = arith.constant 0 : index
    %0 = vector.load %arg1[%c0, %c0_0] : memref<8x128xf32, #tpu.memory_space<vmem>>, vector<8x128xf32>
    %c0_1 = arith.constant 0 : index
    %c0_2 = arith.constant 0 : index
    %1 = vector.load %arg4[%c0_1, %c0_2] : memref<8x128xf32, #tpu.memory_space<vmem>>, vector<8x128xf32>
    %c0_3 = arith.constant 0 : index
    %c0_4 = arith.constant 0 : index
    %2 = vector.load %arg5[%c0_3, %c0_4] : memref<8x128xf32, #tpu.memory_space<vmem>>, vector<8x128xf32>
    %c1_i32 = arith.constant 1 : i32
    %3 = tpu.dynamic_rotate %0 by %c1_i32 dim 1 : vector<8x128xf32>, i32 -> vector<8x128xf32>
    %4 = arith.mulf %3, %1 : vector<8x128xf32>
    %c0_5 = arith.constant 0 : index
    %c0_6 = arith.constant 0 : index
    %5 = vector.load %arg7[%c0_5, %c0_6] : memref<24x128xf32, #tpu.memory_space<vmem>>, vector<8x128xf32>
    tpu.vector_store %arg7[%c0_5, %c0_6], %4 {strides = array<i32>} : memref<24x128xf32, #tpu.memory_space<vmem>>, vector<8x128xf32>,
    %c8 = arith.constant 8 : index
    %c0_7 = arith.constant 0 : index
    %6 = vector.load %arg7[%c8, %c0_7] : memref<24x128xf32, #tpu.memory_space<vmem>>, vector<8x128xf32>
    tpu.vector_store %arg7[%c8, %c0_7], %0 {strides = array<i32>} : memref<24x128xf32, #tpu.memory_space<vmem>>, vector<8x128xf32>,
    %c127_i32 = arith.constant 127 : i32
    %7 = tpu.dynamic_rotate %0 by %c127_i32 dim 1 : vector<8x128xf32>, i32 -> vector<8x128xf32>
    %8 = arith.mulf %7, %2 : vector<8x128xf32>
    %c16 = arith.constant 16 : index
    %c0_8 = arith.constant 0 : index
    %9 = vector.load %arg7[%c16, %c0_8] : memref<24x128xf32, #tpu.memory_space<vmem>>, vector<8x128xf32>
    tpu.vector_store %arg7[%c16, %c0_8], %8 {strides = array<i32>} : memref<24x128xf32, #tpu.memory_space<vmem>>, vector<8x128xf32>,
    %c0_9 = arith.constant 0 : index
    %c0_10 = arith.constant 0 : index
    %c0_11 = arith.constant 0 : index
    %10 = vector.load %arg2[%c0_9, %c0_10, %c0_11] : memref<10x8x24xf32, #tpu.memory_space<vmem>>, vector<1x8x24xf32>
    %11 = vector.shape_cast %10 : vector<1x8x24xf32> to vector<8x24xf32>
    %c0_12 = arith.constant 0 : index
    %c0_13 = arith.constant 0 : index
    %12 = vector.load %arg7[%c0_12, %c0_13] : memref<24x128xf32, #tpu.memory_space<vmem>>, vector<24x128xf32>
    %cst = arith.constant dense<0.000000e+00> : vector<8x128xf32>
    %13 = tpu.matmul %11, %12, %cst {dimension_numbers = #tpu.dot_dimension_numbers<[1], [0], [0], [1], [0, 0, 1, 1], [], []>} : vector<8x24xf32>, vector<24x128xf32>, vector<8x128xf32> -> vector<8x128xf32>
    %cst_14 = arith.constant 0.000000e+00 : f32
    %14 = vector.broadcast %cst_14 : f32 to vector<8x128xf32>
    %15 = arith.cmpf ogt, %13, %14 : vector<8x128xf32>
    %cst_15 = arith.constant 2.000000e-01 : f32
    %16 = vector.broadcast %cst_15 : f32 to vector<8x128xf32>
    %17 = arith.mulf %16, %13 : vector<8x128xf32>
    %18 = arith.select %15, %13, %17 : vector<8x128xi1>, vector<8x128xf32>
    %c1_i32_16 = arith.constant 1 : i32
    %19 = tpu.dynamic_rotate %18 by %c1_i32_16 dim 1 : vector<8x128xf32>, i32 -> vector<8x128xf32>
    %20 = arith.mulf %19, %1 : vector<8x128xf32>
    %c0_17 = arith.constant 0 : index
    %c0_18 = arith.constant 0 : index
    %21 = vector.load %arg7[%c0_17, %c0_18] : memref<24x128xf32, #tpu.memory_space<vmem>>, vector<8x128xf32>
    tpu.vector_store %arg7[%c0_17, %c0_18], %20 {strides = array<i32>} : memref<24x128xf32, #tpu.memory_space<vmem>>, vector<8x128xf32>,
    %c8_19 = arith.constant 8 : index
    %c0_20 = arith.constant 0 : index
    %22 = vector.load %arg7[%c8_19, %c0_20] : memref<24x128xf32, #tpu.memory_space<vmem>>, vector<8x128xf32>
    tpu.vector_store %arg7[%c8_19, %c0_20], %18 {strides = array<i32>} : memref<24x128xf32, #tpu.memory_space<vmem>>, vector<8x128xf32>,
    %c127_i32_21 = arith.constant 127 : i32
    %23 = tpu.dynamic_rotate %18 by %c127_i32_21 dim 1 : vector<8x128xf32>, i32 -> vector<8x128xf32>
    %24 = arith.mulf %23, %2 : vector<8x128xf32>
    %c16_22 = arith.constant 16 : index
    %c0_23 = arith.constant 0 : index
    %25 = vector.load %arg7[%c16_22, %c0_23] : memref<24x128xf32, #tpu.memory_space<vmem>>, vector<8x128xf32>
    tpu.vector_store %arg7[%c16_22, %c0_23], %24 {strides = array<i32>} : memref<24x128xf32, #tpu.memory_space<vmem>>, vector<8x128xf32>,
    %c1 = arith.constant 1 : index
    %c0_24 = arith.constant 0 : index
    %c0_25 = arith.constant 0 : index
    %26 = vector.load %arg2[%c1, %c0_24, %c0_25] : memref<10x8x24xf32, #tpu.memory_space<vmem>>, vector<1x8x24xf32>
    %27 = vector.shape_cast %26 : vector<1x8x24xf32> to vector<8x24xf32>
    %c0_26 = arith.constant 0 : index
    %c0_27 = arith.constant 0 : index
    %28 = vector.load %arg7[%c0_26, %c0_27] : memref<24x128xf32, #tpu.memory_space<vmem>>, vector<24x128xf32>
    %cst_28 = arith.constant dense<0.000000e+00> : vector<8x128xf32>
    %29 = tpu.matmul %27, %28, %cst_28 {dimension_numbers = #tpu.dot_dimension_numbers<[1], [0], [0], [1], [0, 0, 1, 1], [], []>} : vector<8x24xf32>, vector<24x128xf32>, vector<8x128xf32> -> vector<8x128xf32>
    %cst_29 = arith.constant 0.000000e+00 : f32
    %30 = vector.broadcast %cst_29 : f32 to vector<8x128xf32>
    %31 = arith.cmpf ogt, %29, %30 : vector<8x128xf32>
    %cst_30 = arith.constant 2.000000e-01 : f32
    %32 = vector.broadcast %cst_30 : f32 to vector<8x128xf32>
    %33 = arith.mulf %32, %29 : vector<8x128xf32>
    %34 = arith.select %31, %29, %33 : vector<8x128xi1>, vector<8x128xf32>
    %c1_i32_31 = arith.constant 1 : i32
    %35 = tpu.dynamic_rotate %34 by %c1_i32_31 dim 1 : vector<8x128xf32>, i32 -> vector<8x128xf32>
    %36 = arith.mulf %35, %1 : vector<8x128xf32>
    %c0_32 = arith.constant 0 : index
    %c0_33 = arith.constant 0 : index
    %37 = vector.load %arg7[%c0_32, %c0_33] : memref<24x128xf32, #tpu.memory_space<vmem>>, vector<8x128xf32>
    tpu.vector_store %arg7[%c0_32, %c0_33], %36 {strides = array<i32>} : memref<24x128xf32, #tpu.memory_space<vmem>>, vector<8x128xf32>,
    %c8_34 = arith.constant 8 : index
    %c0_35 = arith.constant 0 : index
    %38 = vector.load %arg7[%c8_34, %c0_35] : memref<24x128xf32, #tpu.memory_space<vmem>>, vector<8x128xf32>
    tpu.vector_store %arg7[%c8_34, %c0_35], %34 {strides = array<i32>} : memref<24x128xf32, #tpu.memory_space<vmem>>, vector<8x128xf32>,
    %c127_i32_36 = arith.constant 127 : i32
    %39 = tpu.dynamic_rotate %34 by %c127_i32_36 dim 1 : vector<8x128xf32>, i32 -> vector<8x128xf32>
    %40 = arith.mulf %39, %2 : vector<8x128xf32>
    %c16_37 = arith.constant 16 : index
    %c0_38 = arith.constant 0 : index
    %41 = vector.load %arg7[%c16_37, %c0_38] : memref<24x128xf32, #tpu.memory_space<vmem>>, vector<8x128xf32>
    tpu.vector_store %arg7[%c16_37, %c0_38], %40 {strides = array<i32>} : memref<24x128xf32, #tpu.memory_space<vmem>>, vector<8x128xf32>,
    %c2 = arith.constant 2 : index
    %c0_39 = arith.constant 0 : index
    %c0_40 = arith.constant 0 : index
    %42 = vector.load %arg2[%c2, %c0_39, %c0_40] : memref<10x8x24xf32, #tpu.memory_space<vmem>>, vector<1x8x24xf32>
    %43 = vector.shape_cast %42 : vector<1x8x24xf32> to vector<8x24xf32>
    %c0_41 = arith.constant 0 : index
    %c0_42 = arith.constant 0 : index
    %44 = vector.load %arg7[%c0_41, %c0_42] : memref<24x128xf32, #tpu.memory_space<vmem>>, vector<24x128xf32>
    %cst_43 = arith.constant dense<0.000000e+00> : vector<8x128xf32>
    %45 = tpu.matmul %43, %44, %cst_43 {dimension_numbers = #tpu.dot_dimension_numbers<[1], [0], [0], [1], [0, 0, 1, 1], [], []>} : vector<8x24xf32>, vector<24x128xf32>, vector<8x128xf32> -> vector<8x128xf32>
    %cst_44 = arith.constant 0.000000e+00 : f32
    %46 = vector.broadcast %cst_44 : f32 to vector<8x128xf32>
    %47 = arith.cmpf ogt, %45, %46 : vector<8x128xf32>
    %cst_45 = arith.constant 2.000000e-01 : f32
    %48 = vector.broadcast %cst_45 : f32 to vector<8x128xf32>
    %49 = arith.mulf %48, %45 : vector<8x128xf32>
    %50 = arith.select %47, %45, %49 : vector<8x128xi1>, vector<8x128xf32>
    %c1_i32_46 = arith.constant 1 : i32
    %51 = tpu.dynamic_rotate %50 by %c1_i32_46 dim 1 : vector<8x128xf32>, i32 -> vector<8x128xf32>
    %52 = arith.mulf %51, %1 : vector<8x128xf32>
    %c0_47 = arith.constant 0 : index
    %c0_48 = arith.constant 0 : index
    %53 = vector.load %arg7[%c0_47, %c0_48] : memref<24x128xf32, #tpu.memory_space<vmem>>, vector<8x128xf32>
    tpu.vector_store %arg7[%c0_47, %c0_48], %52 {strides = array<i32>} : memref<24x128xf32, #tpu.memory_space<vmem>>, vector<8x128xf32>,
    %c8_49 = arith.constant 8 : index
    %c0_50 = arith.constant 0 : index
    %54 = vector.load %arg7[%c8_49, %c0_50] : memref<24x128xf32, #tpu.memory_space<vmem>>, vector<8x128xf32>
    tpu.vector_store %arg7[%c8_49, %c0_50], %50 {strides = array<i32>} : memref<24x128xf32, #tpu.memory_space<vmem>>, vector<8x128xf32>,
    %c127_i32_51 = arith.constant 127 : i32
    %55 = tpu.dynamic_rotate %50 by %c127_i32_51 dim 1 : vector<8x128xf32>, i32 -> vector<8x128xf32>
    %56 = arith.mulf %55, %2 : vector<8x128xf32>
    %c16_52 = arith.constant 16 : index
    %c0_53 = arith.constant 0 : index
    %57 = vector.load %arg7[%c16_52, %c0_53] : memref<24x128xf32, #tpu.memory_space<vmem>>, vector<8x128xf32>
    tpu.vector_store %arg7[%c16_52, %c0_53], %56 {strides = array<i32>} : memref<24x128xf32, #tpu.memory_space<vmem>>, vector<8x128xf32>,
    %c3 = arith.constant 3 : index
    %c0_54 = arith.constant 0 : index
    %c0_55 = arith.constant 0 : index
    %58 = vector.load %arg2[%c3, %c0_54, %c0_55] : memref<10x8x24xf32, #tpu.memory_space<vmem>>, vector<1x8x24xf32>
    %59 = vector.shape_cast %58 : vector<1x8x24xf32> to vector<8x24xf32>
    %c0_56 = arith.constant 0 : index
    %c0_57 = arith.constant 0 : index
    %60 = vector.load %arg7[%c0_56, %c0_57] : memref<24x128xf32, #tpu.memory_space<vmem>>, vector<24x128xf32>
    %cst_58 = arith.constant dense<0.000000e+00> : vector<8x128xf32>
    %61 = tpu.matmul %59, %60, %cst_58 {dimension_numbers = #tpu.dot_dimension_numbers<[1], [0], [0], [1], [0, 0, 1, 1], [], []>} : vector<8x24xf32>, vector<24x128xf32>, vector<8x128xf32> -> vector<8x128xf32>
    %cst_59 = arith.constant 0.000000e+00 : f32
    %62 = vector.broadcast %cst_59 : f32 to vector<8x128xf32>
    %63 = arith.cmpf ogt, %61, %62 : vector<8x128xf32>
    %cst_60 = arith.constant 2.000000e-01 : f32
    %64 = vector.broadcast %cst_60 : f32 to vector<8x128xf32>
    %65 = arith.mulf %64, %61 : vector<8x128xf32>
    %66 = arith.select %63, %61, %65 : vector<8x128xi1>, vector<8x128xf32>
    %c1_i32_61 = arith.constant 1 : i32
    %67 = tpu.dynamic_rotate %66 by %c1_i32_61 dim 1 : vector<8x128xf32>, i32 -> vector<8x128xf32>
    %68 = arith.mulf %67, %1 : vector<8x128xf32>
    %c0_62 = arith.constant 0 : index
    %c0_63 = arith.constant 0 : index
    %69 = vector.load %arg7[%c0_62, %c0_63] : memref<24x128xf32, #tpu.memory_space<vmem>>, vector<8x128xf32>
    tpu.vector_store %arg7[%c0_62, %c0_63], %68 {strides = array<i32>} : memref<24x128xf32, #tpu.memory_space<vmem>>, vector<8x128xf32>,
    %c8_64 = arith.constant 8 : index
    %c0_65 = arith.constant 0 : index
    %70 = vector.load %arg7[%c8_64, %c0_65] : memref<24x128xf32, #tpu.memory_space<vmem>>, vector<8x128xf32>
    tpu.vector_store %arg7[%c8_64, %c0_65], %66 {strides = array<i32>} : memref<24x128xf32, #tpu.memory_space<vmem>>, vector<8x128xf32>,
    %c127_i32_66 = arith.constant 127 : i32
    %71 = tpu.dynamic_rotate %66 by %c127_i32_66 dim 1 : vector<8x128xf32>, i32 -> vector<8x128xf32>
    %72 = arith.mulf %71, %2 : vector<8x128xf32>
    %c16_67 = arith.constant 16 : index
    %c0_68 = arith.constant 0 : index
    %73 = vector.load %arg7[%c16_67, %c0_68] : memref<24x128xf32, #tpu.memory_space<vmem>>, vector<8x128xf32>
    tpu.vector_store %arg7[%c16_67, %c0_68], %72 {strides = array<i32>} : memref<24x128xf32, #tpu.memory_space<vmem>>, vector<8x128xf32>,
    %c4 = arith.constant 4 : index
    %c0_69 = arith.constant 0 : index
    %c0_70 = arith.constant 0 : index
    %74 = vector.load %arg2[%c4, %c0_69, %c0_70] : memref<10x8x24xf32, #tpu.memory_space<vmem>>, vector<1x8x24xf32>
    %75 = vector.shape_cast %74 : vector<1x8x24xf32> to vector<8x24xf32>
    %c0_71 = arith.constant 0 : index
    %c0_72 = arith.constant 0 : index
    %76 = vector.load %arg7[%c0_71, %c0_72] : memref<24x128xf32, #tpu.memory_space<vmem>>, vector<24x128xf32>
    %cst_73 = arith.constant dense<0.000000e+00> : vector<8x128xf32>
    %77 = tpu.matmul %75, %76, %cst_73 {dimension_numbers = #tpu.dot_dimension_numbers<[1], [0], [0], [1], [0, 0, 1, 1], [], []>} : vector<8x24xf32>, vector<24x128xf32>, vector<8x128xf32> -> vector<8x128xf32>
    %cst_74 = arith.constant 0.000000e+00 : f32
    %78 = vector.broadcast %cst_74 : f32 to vector<8x128xf32>
    %79 = arith.cmpf ogt, %77, %78 : vector<8x128xf32>
    %cst_75 = arith.constant 2.000000e-01 : f32
    %80 = vector.broadcast %cst_75 : f32 to vector<8x128xf32>
    %81 = arith.mulf %80, %77 : vector<8x128xf32>
    %82 = arith.select %79, %77, %81 : vector<8x128xi1>, vector<8x128xf32>
    %c1_i32_76 = arith.constant 1 : i32
    %83 = tpu.dynamic_rotate %82 by %c1_i32_76 dim 1 : vector<8x128xf32>, i32 -> vector<8x128xf32>
    %84 = arith.mulf %83, %1 : vector<8x128xf32>
    %c0_77 = arith.constant 0 : index
    %c0_78 = arith.constant 0 : index
    %85 = vector.load %arg7[%c0_77, %c0_78] : memref<24x128xf32, #tpu.memory_space<vmem>>, vector<8x128xf32>
    tpu.vector_store %arg7[%c0_77, %c0_78], %84 {strides = array<i32>} : memref<24x128xf32, #tpu.memory_space<vmem>>, vector<8x128xf32>,
    %c8_79 = arith.constant 8 : index
    %c0_80 = arith.constant 0 : index
    %86 = vector.load %arg7[%c8_79, %c0_80] : memref<24x128xf32, #tpu.memory_space<vmem>>, vector<8x128xf32>
    tpu.vector_store %arg7[%c8_79, %c0_80], %82 {strides = array<i32>} : memref<24x128xf32, #tpu.memory_space<vmem>>, vector<8x128xf32>,
    %c127_i32_81 = arith.constant 127 : i32
    %87 = tpu.dynamic_rotate %82 by %c127_i32_81 dim 1 : vector<8x128xf32>, i32 -> vector<8x128xf32>
    %88 = arith.mulf %87, %2 : vector<8x128xf32>
    %c16_82 = arith.constant 16 : index
    %c0_83 = arith.constant 0 : index
    %89 = vector.load %arg7[%c16_82, %c0_83] : memref<24x128xf32, #tpu.memory_space<vmem>>, vector<8x128xf32>
    tpu.vector_store %arg7[%c16_82, %c0_83], %88 {strides = array<i32>} : memref<24x128xf32, #tpu.memory_space<vmem>>, vector<8x128xf32>,
    %c5 = arith.constant 5 : index
    %c0_84 = arith.constant 0 : index
    %c0_85 = arith.constant 0 : index
    %90 = vector.load %arg2[%c5, %c0_84, %c0_85] : memref<10x8x24xf32, #tpu.memory_space<vmem>>, vector<1x8x24xf32>
    %91 = vector.shape_cast %90 : vector<1x8x24xf32> to vector<8x24xf32>
    %c0_86 = arith.constant 0 : index
    %c0_87 = arith.constant 0 : index
    %92 = vector.load %arg7[%c0_86, %c0_87] : memref<24x128xf32, #tpu.memory_space<vmem>>, vector<24x128xf32>
    %cst_88 = arith.constant dense<0.000000e+00> : vector<8x128xf32>
    %93 = tpu.matmul %91, %92, %cst_88 {dimension_numbers = #tpu.dot_dimension_numbers<[1], [0], [0], [1], [0, 0, 1, 1], [], []>} : vector<8x24xf32>, vector<24x128xf32>, vector<8x128xf32> -> vector<8x128xf32>
    %cst_89 = arith.constant 0.000000e+00 : f32
    %94 = vector.broadcast %cst_89 : f32 to vector<8x128xf32>
    %95 = arith.cmpf ogt, %93, %94 : vector<8x128xf32>
    %cst_90 = arith.constant 2.000000e-01 : f32
    %96 = vector.broadcast %cst_90 : f32 to vector<8x128xf32>
    %97 = arith.mulf %96, %93 : vector<8x128xf32>
    %98 = arith.select %95, %93, %97 : vector<8x128xi1>, vector<8x128xf32>
    %c1_i32_91 = arith.constant 1 : i32
    %99 = tpu.dynamic_rotate %98 by %c1_i32_91 dim 1 : vector<8x128xf32>, i32 -> vector<8x128xf32>
    %100 = arith.mulf %99, %1 : vector<8x128xf32>
    %c0_92 = arith.constant 0 : index
    %c0_93 = arith.constant 0 : index
    %101 = vector.load %arg7[%c0_92, %c0_93] : memref<24x128xf32, #tpu.memory_space<vmem>>, vector<8x128xf32>
    tpu.vector_store %arg7[%c0_92, %c0_93], %100 {strides = array<i32>} : memref<24x128xf32, #tpu.memory_space<vmem>>, vector<8x128xf32>,
    %c8_94 = arith.constant 8 : index
    %c0_95 = arith.constant 0 : index
    %102 = vector.load %arg7[%c8_94, %c0_95] : memref<24x128xf32, #tpu.memory_space<vmem>>, vector<8x128xf32>
    tpu.vector_store %arg7[%c8_94, %c0_95], %98 {strides = array<i32>} : memref<24x128xf32, #tpu.memory_space<vmem>>, vector<8x128xf32>,
    %c127_i32_96 = arith.constant 127 : i32
    %103 = tpu.dynamic_rotate %98 by %c127_i32_96 dim 1 : vector<8x128xf32>, i32 -> vector<8x128xf32>
    %104 = arith.mulf %103, %2 : vector<8x128xf32>
    %c16_97 = arith.constant 16 : index
    %c0_98 = arith.constant 0 : index
    %105 = vector.load %arg7[%c16_97, %c0_98] : memref<24x128xf32, #tpu.memory_space<vmem>>, vector<8x128xf32>
    tpu.vector_store %arg7[%c16_97, %c0_98], %104 {strides = array<i32>} : memref<24x128xf32, #tpu.memory_space<vmem>>, vector<8x128xf32>,
    %c6 = arith.constant 6 : index
    %c0_99 = arith.constant 0 : index
    %c0_100 = arith.constant 0 : index
    %106 = vector.load %arg2[%c6, %c0_99, %c0_100] : memref<10x8x24xf32, #tpu.memory_space<vmem>>, vector<1x8x24xf32>
    %107 = vector.shape_cast %106 : vector<1x8x24xf32> to vector<8x24xf32>
    %c0_101 = arith.constant 0 : index
    %c0_102 = arith.constant 0 : index
    %108 = vector.load %arg7[%c0_101, %c0_102] : memref<24x128xf32, #tpu.memory_space<vmem>>, vector<24x128xf32>
    %cst_103 = arith.constant dense<0.000000e+00> : vector<8x128xf32>
    %109 = tpu.matmul %107, %108, %cst_103 {dimension_numbers = #tpu.dot_dimension_numbers<[1], [0], [0], [1], [0, 0, 1, 1], [], []>} : vector<8x24xf32>, vector<24x128xf32>, vector<8x128xf32> -> vector<8x128xf32>
    %cst_104 = arith.constant 0.000000e+00 : f32
    %110 = vector.broadcast %cst_104 : f32 to vector<8x128xf32>
    %111 = arith.cmpf ogt, %109, %110 : vector<8x128xf32>
    %cst_105 = arith.constant 2.000000e-01 : f32
    %112 = vector.broadcast %cst_105 : f32 to vector<8x128xf32>
    %113 = arith.mulf %112, %109 : vector<8x128xf32>
    %114 = arith.select %111, %109, %113 : vector<8x128xi1>, vector<8x128xf32>
    %c1_i32_106 = arith.constant 1 : i32
    %115 = tpu.dynamic_rotate %114 by %c1_i32_106 dim 1 : vector<8x128xf32>, i32 -> vector<8x128xf32>
    %116 = arith.mulf %115, %1 : vector<8x128xf32>
    %c0_107 = arith.constant 0 : index
    %c0_108 = arith.constant 0 : index
    %117 = vector.load %arg7[%c0_107, %c0_108] : memref<24x128xf32, #tpu.memory_space<vmem>>, vector<8x128xf32>
    tpu.vector_store %arg7[%c0_107, %c0_108], %116 {strides = array<i32>} : memref<24x128xf32, #tpu.memory_space<vmem>>, vector<8x128xf32>,
    %c8_109 = arith.constant 8 : index
    %c0_110 = arith.constant 0 : index
    %118 = vector.load %arg7[%c8_109, %c0_110] : memref<24x128xf32, #tpu.memory_space<vmem>>, vector<8x128xf32>
    tpu.vector_store %arg7[%c8_109, %c0_110], %114 {strides = array<i32>} : memref<24x128xf32, #tpu.memory_space<vmem>>, vector<8x128xf32>,
    %c127_i32_111 = arith.constant 127 : i32
    %119 = tpu.dynamic_rotate %114 by %c127_i32_111 dim 1 : vector<8x128xf32>, i32 -> vector<8x128xf32>
    %120 = arith.mulf %119, %2 : vector<8x128xf32>
    %c16_112 = arith.constant 16 : index
    %c0_113 = arith.constant 0 : index
    %121 = vector.load %arg7[%c16_112, %c0_113] : memref<24x128xf32, #tpu.memory_space<vmem>>, vector<8x128xf32>
    tpu.vector_store %arg7[%c16_112, %c0_113], %120 {strides = array<i32>} : memref<24x128xf32, #tpu.memory_space<vmem>>, vector<8x128xf32>,
    %c7 = arith.constant 7 : index
    %c0_114 = arith.constant 0 : index
    %c0_115 = arith.constant 0 : index
    %122 = vector.load %arg2[%c7, %c0_114, %c0_115] : memref<10x8x24xf32, #tpu.memory_space<vmem>>, vector<1x8x24xf32>
    %123 = vector.shape_cast %122 : vector<1x8x24xf32> to vector<8x24xf32>
    %c0_116 = arith.constant 0 : index
    %c0_117 = arith.constant 0 : index
    %124 = vector.load %arg7[%c0_116, %c0_117] : memref<24x128xf32, #tpu.memory_space<vmem>>, vector<24x128xf32>
    %cst_118 = arith.constant dense<0.000000e+00> : vector<8x128xf32>
    %125 = tpu.matmul %123, %124, %cst_118 {dimension_numbers = #tpu.dot_dimension_numbers<[1], [0], [0], [1], [0, 0, 1, 1], [], []>} : vector<8x24xf32>, vector<24x128xf32>, vector<8x128xf32> -> vector<8x128xf32>
    %cst_119 = arith.constant 0.000000e+00 : f32
    %126 = vector.broadcast %cst_119 : f32 to vector<8x128xf32>
    %127 = arith.cmpf ogt, %125, %126 : vector<8x128xf32>
    %cst_120 = arith.constant 2.000000e-01 : f32
    %128 = vector.broadcast %cst_120 : f32 to vector<8x128xf32>
    %129 = arith.mulf %128, %125 : vector<8x128xf32>
    %130 = arith.select %127, %125, %129 : vector<8x128xi1>, vector<8x128xf32>
    %c1_i32_121 = arith.constant 1 : i32
    %131 = tpu.dynamic_rotate %130 by %c1_i32_121 dim 1 : vector<8x128xf32>, i32 -> vector<8x128xf32>
    %132 = arith.mulf %131, %1 : vector<8x128xf32>
    %c0_122 = arith.constant 0 : index
    %c0_123 = arith.constant 0 : index
    %133 = vector.load %arg7[%c0_122, %c0_123] : memref<24x128xf32, #tpu.memory_space<vmem>>, vector<8x128xf32>
    tpu.vector_store %arg7[%c0_122, %c0_123], %132 {strides = array<i32>} : memref<24x128xf32, #tpu.memory_space<vmem>>, vector<8x128xf32>,
    %c8_124 = arith.constant 8 : index
    %c0_125 = arith.constant 0 : index
    %134 = vector.load %arg7[%c8_124, %c0_125] : memref<24x128xf32, #tpu.memory_space<vmem>>, vector<8x128xf32>
    tpu.vector_store %arg7[%c8_124, %c0_125], %130 {strides = array<i32>} : memref<24x128xf32, #tpu.memory_space<vmem>>, vector<8x128xf32>,
    %c127_i32_126 = arith.constant 127 : i32
    %135 = tpu.dynamic_rotate %130 by %c127_i32_126 dim 1 : vector<8x128xf32>, i32 -> vector<8x128xf32>
    %136 = arith.mulf %135, %2 : vector<8x128xf32>
    %c16_127 = arith.constant 16 : index
    %c0_128 = arith.constant 0 : index
    %137 = vector.load %arg7[%c16_127, %c0_128] : memref<24x128xf32, #tpu.memory_space<vmem>>, vector<8x128xf32>
    tpu.vector_store %arg7[%c16_127, %c0_128], %136 {strides = array<i32>} : memref<24x128xf32, #tpu.memory_space<vmem>>, vector<8x128xf32>,
    %c8_129 = arith.constant 8 : index
    %c0_130 = arith.constant 0 : index
    %c0_131 = arith.constant 0 : index
    %138 = vector.load %arg2[%c8_129, %c0_130, %c0_131] : memref<10x8x24xf32, #tpu.memory_space<vmem>>, vector<1x8x24xf32>
    %139 = vector.shape_cast %138 : vector<1x8x24xf32> to vector<8x24xf32>
    %c0_132 = arith.constant 0 : index
    %c0_133 = arith.constant 0 : index
    %140 = vector.load %arg7[%c0_132, %c0_133] : memref<24x128xf32, #tpu.memory_space<vmem>>, vector<24x128xf32>
    %cst_134 = arith.constant dense<0.000000e+00> : vector<8x128xf32>
    %141 = tpu.matmul %139, %140, %cst_134 {dimension_numbers = #tpu.dot_dimension_numbers<[1], [0], [0], [1], [0, 0, 1, 1], [], []>} : vector<8x24xf32>, vector<24x128xf32>, vector<8x128xf32> -> vector<8x128xf32>
    %cst_135 = arith.constant 0.000000e+00 : f32
    %142 = vector.broadcast %cst_135 : f32 to vector<8x128xf32>
    %143 = arith.cmpf ogt, %141, %142 : vector<8x128xf32>
    %cst_136 = arith.constant 2.000000e-01 : f32
    %144 = vector.broadcast %cst_136 : f32 to vector<8x128xf32>
    %145 = arith.mulf %144, %141 : vector<8x128xf32>
    %146 = arith.select %143, %141, %145 : vector<8x128xi1>, vector<8x128xf32>
    %c1_i32_137 = arith.constant 1 : i32
    %147 = tpu.dynamic_rotate %146 by %c1_i32_137 dim 1 : vector<8x128xf32>, i32 -> vector<8x128xf32>
    %148 = arith.mulf %147, %1 : vector<8x128xf32>
    %c0_138 = arith.constant 0 : index
    %c0_139 = arith.constant 0 : index
    %149 = vector.load %arg7[%c0_138, %c0_139] : memref<24x128xf32, #tpu.memory_space<vmem>>, vector<8x128xf32>
    tpu.vector_store %arg7[%c0_138, %c0_139], %148 {strides = array<i32>} : memref<24x128xf32, #tpu.memory_space<vmem>>, vector<8x128xf32>,
    %c8_140 = arith.constant 8 : index
    %c0_141 = arith.constant 0 : index
    %150 = vector.load %arg7[%c8_140, %c0_141] : memref<24x128xf32, #tpu.memory_space<vmem>>, vector<8x128xf32>
    tpu.vector_store %arg7[%c8_140, %c0_141], %146 {strides = array<i32>} : memref<24x128xf32, #tpu.memory_space<vmem>>, vector<8x128xf32>,
    %c127_i32_142 = arith.constant 127 : i32
    %151 = tpu.dynamic_rotate %146 by %c127_i32_142 dim 1 : vector<8x128xf32>, i32 -> vector<8x128xf32>
    %152 = arith.mulf %151, %2 : vector<8x128xf32>
    %c16_143 = arith.constant 16 : index
    %c0_144 = arith.constant 0 : index
    %153 = vector.load %arg7[%c16_143, %c0_144] : memref<24x128xf32, #tpu.memory_space<vmem>>, vector<8x128xf32>
    tpu.vector_store %arg7[%c16_143, %c0_144], %152 {strides = array<i32>} : memref<24x128xf32, #tpu.memory_space<vmem>>, vector<8x128xf32>,
    %c9 = arith.constant 9 : index
    %c0_145 = arith.constant 0 : index
    %c0_146 = arith.constant 0 : index
    %154 = vector.load %arg2[%c9, %c0_145, %c0_146] : memref<10x8x24xf32, #tpu.memory_space<vmem>>, vector<1x8x24xf32>
    %155 = vector.shape_cast %154 : vector<1x8x24xf32> to vector<8x24xf32>
    %c0_147 = arith.constant 0 : index
    %c0_148 = arith.constant 0 : index
    %156 = vector.load %arg7[%c0_147, %c0_148] : memref<24x128xf32, #tpu.memory_space<vmem>>, vector<24x128xf32>
    %cst_149 = arith.constant dense<0.000000e+00> : vector<8x128xf32>
    %157 = tpu.matmul %155, %156, %cst_149 {dimension_numbers = #tpu.dot_dimension_numbers<[1], [0], [0], [1], [0, 0, 1, 1], [], []>} : vector<8x24xf32>, vector<24x128xf32>, vector<8x128xf32> -> vector<8x128xf32>
    %cst_150 = arith.constant 0.000000e+00 : f32
    %158 = vector.broadcast %cst_150 : f32 to vector<8x128xf32>
    %159 = arith.cmpf ogt, %157, %158 : vector<8x128xf32>
    %cst_151 = arith.constant 2.000000e-01 : f32
    %160 = vector.broadcast %cst_151 : f32 to vector<8x128xf32>
    %161 = arith.mulf %160, %157 : vector<8x128xf32>
    %162 = arith.select %159, %157, %161 : vector<8x128xi1>, vector<8x128xf32>
    %c1_i32_152 = arith.constant 1 : i32
    %163 = tpu.dynamic_rotate %162 by %c1_i32_152 dim 1 : vector<8x128xf32>, i32 -> vector<8x128xf32>
    %164 = arith.mulf %163, %1 : vector<8x128xf32>
    %c0_153 = arith.constant 0 : index
    %c0_154 = arith.constant 0 : index
    %165 = vector.load %arg7[%c0_153, %c0_154] : memref<24x128xf32, #tpu.memory_space<vmem>>, vector<8x128xf32>
    tpu.vector_store %arg7[%c0_153, %c0_154], %164 {strides = array<i32>} : memref<24x128xf32, #tpu.memory_space<vmem>>, vector<8x128xf32>,
    %c8_155 = arith.constant 8 : index
    %c0_156 = arith.constant 0 : index
    %166 = vector.load %arg7[%c8_155, %c0_156] : memref<24x128xf32, #tpu.memory_space<vmem>>, vector<8x128xf32>
    tpu.vector_store %arg7[%c8_155, %c0_156], %162 {strides = array<i32>} : memref<24x128xf32, #tpu.memory_space<vmem>>, vector<8x128xf32>,
    %c127_i32_157 = arith.constant 127 : i32
    %167 = tpu.dynamic_rotate %162 by %c127_i32_157 dim 1 : vector<8x128xf32>, i32 -> vector<8x128xf32>
    %168 = arith.mulf %167, %2 : vector<8x128xf32>
    %c16_158 = arith.constant 16 : index
    %c0_159 = arith.constant 0 : index
    %169 = vector.load %arg7[%c16_158, %c0_159] : memref<24x128xf32, #tpu.memory_space<vmem>>, vector<8x128xf32>
    tpu.vector_store %arg7[%c16_158, %c0_159], %168 {strides = array<i32>} : memref<24x128xf32, #tpu.memory_space<vmem>>, vector<8x128xf32>,
    %c0_160 = arith.constant 0 : index
    %c0_161 = arith.constant 0 : index
    %170 = vector.load %arg3[%c0_160, %c0_161] : memref<16x24xf32, #tpu.memory_space<vmem>>, vector<16x24xf32>
    %c0_162 = arith.constant 0 : index
    %c0_163 = arith.constant 0 : index
    %171 = vector.load %arg7[%c0_162, %c0_163] : memref<24x128xf32, #tpu.memory_space<vmem>>, vector<24x128xf32>
    %cst_164 = arith.constant dense<0.000000e+00> : vector<16x128xf32>
    %172 = tpu.matmul %170, %171, %cst_164 {dimension_numbers = #tpu.dot_dimension_numbers<[1], [0], [0], [1], [0, 0, 1, 1], [], []>} : vector<16x24xf32>, vector<24x128xf32>, vector<16x128xf32> -> vector<16x128xf32>
    %cst_165 = arith.constant 0.000000e+00 : f32
    %173 = vector.broadcast %cst_165 : f32 to vector<16x128xf32>
    %174 = arith.cmpf ogt, %172, %173 : vector<16x128xf32>
    %cst_166 = arith.constant 2.000000e-01 : f32
    %175 = vector.broadcast %cst_166 : f32 to vector<16x128xf32>
    %176 = arith.mulf %175, %172 : vector<16x128xf32>
    %177 = arith.select %174, %172, %176 : vector<16x128xi1>, vector<16x128xf32>
    %c0_167 = arith.constant 0 : index
    %c0_168 = arith.constant 0 : index
    %178 = vector.load %arg6[%c0_167, %c0_168] : memref<16x128xf32, #tpu.memory_space<vmem>>, vector<16x128xf32>
    tpu.vector_store %arg6[%c0_167, %c0_168], %177 {strides = array<i32>} : memref<16x128xf32, #tpu.memory_space<vmem>>, vector<16x128xf32>,
    return
  }
  func.func @transform_0(%arg0: i32) -> (i32, i32) {
    %c0_i32 = arith.constant 0 : i32
    %c0_i32_0 = arith.constant 0 : i32
    return %c0_i32, %arg0 : i32, i32
  }
  func.func @transform_1(%arg0: i32) -> (i32, i32, i32) {
    %c0_i32 = arith.constant 0 : i32
    %c0_i32_0 = arith.constant 0 : i32
    %c0_i32_1 = arith.constant 0 : i32
    %c0_i32_2 = arith.constant 0 : i32
    return %c0_i32, %c0_i32_0, %c0_i32_1 : i32, i32, i32
  }
  func.func @transform_2(%arg0: i32) -> (i32, i32) {
    %c0_i32 = arith.constant 0 : i32
    %c0_i32_0 = arith.constant 0 : i32
    %c0_i32_1 = arith.constant 0 : i32
    return %c0_i32, %c0_i32_0 : i32, i32
  }
  func.func @transform_3(%arg0: i32) -> (i32, i32) {
    %c0_i32 = arith.constant 0 : i32
    %c0_i32_0 = arith.constant 0 : i32
    %c0_i32_1 = arith.constant 0 : i32
    return %c0_i32, %c0_i32_0 : i32, i32
  }
  func.func @transform_4(%arg0: i32) -> (i32, i32) {
    %c0_i32 = arith.constant 0 : i32
    %c0_i32_0 = arith.constant 0 : i32
    %c0_i32_1 = arith.constant 0 : i32
    return %c0_i32, %c0_i32_0 : i32, i32
  }
  func.func @transform_5(%arg0: i32) -> (i32, i32) {
    %c0_i32 = arith.constant 0 : i32
    %c0_i32_0 = arith.constant 0 : i32
    return %c0_i32, %arg0 : i32, i32
  }
}

</mosaic_0001>

<llo_original>
// kernel: tpu_custom_call.1
$region0: #{tpu_custom_call.1}
  #allocation0 [shape = 'u32[]', space=smem, size = 0x4, offset = 0x4, fixed_abs, tag = 'smem constant byte address 0x4 - core index']
  #allocation1 [shape = 'u32[144,128]{1,0:T(1,128)}', space=vmem, size = 0x12000, scoped, tag = 'internal scratch']
  #allocation2 [shape = 'f32[24,128]{1,0:T(8,128)}', space=vmem, size = 0x3000, scoped, tag = 'scratch operand']
  %s0 = inlined_call_operand.hbm [shape: f32[8,128], index: 0, kind: input, shape index: {}]
  %s1 = inlined_call_operand.hbm [shape: f32[10,8,24], index: 1, kind: input, shape index: {}]
  %s2 = inlined_call_operand.hbm [shape: f32[16,24], index: 2, kind: input, shape index: {}]
  %s3 = inlined_call_operand.vmem [shape: f32[8,128], index: 3, kind: input, shape index: {}]
  %s4 = inlined_call_operand.hbm [shape: f32[8,128], index: 4, kind: input, shape index: {}]
  %s5 = inlined_call_operand.hbm [shape: f32[16,128], index: 5, kind: output, shape index: {}]
  %s6 = sld [smem:[#allocation0]]
  $region46: #{tpu_custom_call.1} parent=0
    _
  %s8 = ssub.s32 1, %s6
  %s9 = scalar_select 0, %s8, %s6
  $region1: #{tpu_custom_call.1} parent=0
    #allocation3 [shape = 'u8[4096]{0}', space=vmem, size = 0x1000, scoped, tag = 'input window, operand 0, single buffered']
    #allocation4 [shape = 's32[1]{0}', space=sflag, size = 0x4, scoped, tag = 'scoped memory for tpu_custom_call.1']
    #allocation5 [shape = 's32[1]{0}', space=sflag, size = 0x4, scoped, tag = 'scoped memory for tpu_custom_call.1']
    #allocation6 [shape = 'u8[40960]{0}', space=vmem, size = 0xa000, scoped, tag = 'input window, operand 1, single buffered']
    #allocation7 [shape = 's32[1]{0}', space=sflag, size = 0x4, scoped, tag = 'scoped memory for tpu_custom_call.1']
    #allocation8 [shape = 'u8[8192]{0}', space=vmem, size = 0x2000, scoped, tag = 'input window, operand 2, single buffered']
    #allocation9 [shape = 'u8[4096]{0}', space=vmem, size = 0x1000, scoped, tag = 'input window, operand 4, single buffered']
    #allocation10 [shape = 's32[1]{0}', space=sflag, size = 0x4, scoped, tag = 'scoped memory for tpu_custom_call.1']
    #allocation11 [shape = 'u8[8192]{0}', space=vmem, size = 0x2000, scoped, tag = 'output window, operand 0, single buffered']
    %10 = vsyncpa [#allocation4], 0
    %11 = vsyncpa [#allocation7], 0
    %12 = vsyncpa [#allocation10], 0
    %13 = vsyncpa [#allocation5], 0
    // Predicated region
    $region2: #{tpu_custom_call.1} parent=1 // pred_check
      _
    $region3: #{tpu_custom_call.1} parent=1 // pred_check_branch
      %15 = sbr.rel (0) target = $region5
    $region4: #{tpu_custom_call.1} parent=1 // pred_region
      %s17 = ssub.s32 128, 128
      %18 = vsyncadd [#allocation4], %s17
      %s20 = sshll.u32 [#allocation3], 4
      %s21 = int_to_ptr.vmem [resolvable:$true] %s20
      %23 = dma.hbm_to_vmem [thread:$0]  %s0, 128, %s21, [#allocation4]
    $region5: #{tpu_custom_call.1} parent=1 // pred_fallthru
      _
    // Predicated region
    $region6: #{tpu_custom_call.1} parent=1 // pred_check
      _
    $region7: #{tpu_custom_call.1} parent=1 // pred_check_branch
      %25 = sbr.rel (0) target = $region9
    $region8: #{tpu_custom_call.1} parent=1 // pred_region
      %s27 = ssub.s32 1280, 1280
      %28 = vsyncadd [#allocation7], %s27
      %s29 = sshll.u32 [#allocation6], 4
      %s30 = int_to_ptr.vmem [resolvable:$true] %s29
      %35 = dma.hbm_to_vmem [thread:$0]  %s1, 1280, %s30, [#allocation7], 128, 128, 8
    $region9: #{tpu_custom_call.1} parent=1 // pred_fallthru
      _
    // Predicated region
    $region10: #{tpu_custom_call.1} parent=1 // pred_check
      _
    $region11: #{tpu_custom_call.1} parent=1 // pred_check_branch
      %37 = sbr.rel (0) target = $region13
    $region12: #{tpu_custom_call.1} parent=1 // pred_region
      %s39 = ssub.s32 256, 256
      %40 = vsyncadd [#allocation7], %s39
      %s41 = sshll.u32 [#allocation8], 4
      %s42 = int_to_ptr.vmem [resolvable:$true] %s41
      %47 = dma.hbm_to_vmem [thread:$0]  %s2, 256, %s42, [#allocation7], 128, 128, 8
    $region13: #{tpu_custom_call.1} parent=1 // pred_fallthru
      _
    // Predicated region
    $region14: #{tpu_custom_call.1} parent=1 // pred_check
      _
    $region15: #{tpu_custom_call.1} parent=1 // pred_check_branch
      %49 = sbr.rel (0) target = $region17
    $region16: #{tpu_custom_call.1} parent=1 // pred_region
      _
    $region17: #{tpu_custom_call.1} parent=1 // pred_fallthru
      _
    // Predicated region
    $region18: #{tpu_custom_call.1} parent=1 // pred_check
      _
    $region19: #{tpu_custom_call.1} parent=1 // pred_check_branch
      %51 = sbr.rel (0) target = $region21
    $region20: #{tpu_custom_call.1} parent=1 // pred_region
      %s53 = ssub.s32 128, 128
      %54 = vsyncadd [#allocation10], %s53
      %s56 = sshll.u32 [#allocation9], 4
      %s57 = int_to_ptr.vmem [resolvable:$true] %s56
      %59 = dma.hbm_to_vmem [thread:$0]  %s4, 128, %s57, [#allocation10]
    $region21: #{tpu_custom_call.1} parent=1 // pred_fallthru
      _
    // Predicated region
    $region22: #{tpu_custom_call.1} parent=1 // pred_check
      _
    $region23: #{tpu_custom_call.1} parent=1 // pred_check_branch
      %61 = sbr.rel (0) target = $region25
    $region24: #{tpu_custom_call.1} parent=1 // pred_region
      %62 = dma.done [#allocation4], 128
    $region25: #{tpu_custom_call.1} parent=1 // pred_fallthru
      _
    // Predicated region
    $region26: #{tpu_custom_call.1} parent=1 // pred_check
      _
    $region27: #{tpu_custom_call.1} parent=1 // pred_check_branch
      %64 = sbr.rel (0) target = $region29
    $region28: #{tpu_custom_call.1} parent=1 // pred_region
      %65 = dma.done [#allocation7], 1280
    $region29: #{tpu_custom_call.1} parent=1 // pred_fallthru
      _
    // Predicated region
    $region30: #{tpu_custom_call.1} parent=1 // pred_check
      _
    $region31: #{tpu_custom_call.1} parent=1 // pred_check_branch
      %67 = sbr.rel (0) target = $region33
    $region32: #{tpu_custom_call.1} parent=1 // pred_region
      %68 = dma.done [#allocation7], 256
    $region33: #{tpu_custom_call.1} parent=1 // pred_fallthru
      _
    // Predicated region
    $region34: #{tpu_custom_call.1} parent=1 // pred_check
      _
    $region35: #{tpu_custom_call.1} parent=1 // pred_check_branch
      %70 = sbr.rel (0) target = $region37
    $region36: #{tpu_custom_call.1} parent=1 // pred_region
      %71 = dma.done [#allocation10], 128
    $region37: #{tpu_custom_call.1} parent=1 // pred_fallthru
      _
    %v72 = vld [vmem:[#allocation3] sm:$0xff]
    %v73 = vld [vmem:[%s3] sm:$0xff]
    %v74 = vld [vmem:[#allocation9] sm:$0xff]
    %75 = vrot.lane.b32.xlu0 %v72, 1
    %v76 = vpop.permute.xlu0 %75
    %v77 = vmul.f32 %v76, %v73
    %78 = vst [vmem:[#allocation2] sm:$0xff] %v77
    %79 = vst [vmem:[#allocation2 + $0x8] sm:$0xff] %v72
    %80 = vrot.lane.b32.xlu0 %v72, 127
    %v81 = vpop.permute.xlu0 %80
    %v82 = vmul.f32 %v81, %v74
    %83 = vst [vmem:[#allocation2 + $0x10] sm:$0xff] %v82
    %v84 = vld [vmem:[#allocation6] sm:$0xff]
    %v85 = vld [vmem:[#allocation2] sm:$0xff]
    %v86 = vld [vmem:[#allocation2 + $0x8] sm:$0xff]
    %v87 = vld [vmem:[#allocation2 + $0x10] sm:$0xff]
    %vm88 = vcmask 195584
    %v90 = vsel %vm88, %v84, 0
    %92 = vmatprep.subr.mxu0 0.0
    %93 = vmatpush1.msra.mxu0 %v85
    %94 = vmatprep.subr.mxu0 0.0
    %95 = vmatpush1.msra.mxu0 %v86
    %96 = vmatprep.subr.mxu0 0.0
    %97 = vmatpush1.msra.mxu0 %v87
    %98 = vmatprep.subr.mxu0 0.0
    %99 = vmatpush1.msra.mxu0 0.0
    %100 = vmatprep.subr.mxu0 0.0
    %101 = vmatpush1.msra.mxu0 0.0
    %102 = vmatprep.subr.mxu0 0.0
    %103 = vmatpush1.msra.mxu0 0.0
    %104 = vmatprep.subr.mxu0 0.0
    %105 = vmatpush1.msra.mxu0 0.0
    %106 = vmatprep.subr.mxu0 0.0
    %107 = vmatpush1.msra.mxu0 0.0
    %108 = vmatprep.subr.mxu0 0.0
    %109 = vmatpush1.msra.mxu0 0.0
    %110 = vmatprep.subr.mxu0 0.0
    %111 = vmatpush1.msra.mxu0 0.0
    %112 = vmatprep.subr.mxu0 0.0
    %113 = vmatpush1.msra.mxu0 0.0
    %114 = vmatprep.subr.mxu0 0.0
    %115 = vmatpush1.msra.mxu0 0.0
    %116 = vmatprep.subr.mxu0 0.0
    %117 = vmatpush1.msra.mxu0 0.0
    %118 = vmatprep.subr.mxu0 0.0
    %119 = vmatpush1.msra.mxu0 0.0
    %120 = vmatprep.subr.mxu0 0.0
    %121 = vmatpush1.msra.mxu0 0.0
    %122 = vmatprep.subr.mxu0 0.0
    %123 = vmatpush1.msra.mxu0 0.0
    %124 = vmatprep.subr.mxu0 0.0
    %125 = vmatpush1.msra.mxu0 0.0
    %126 = vmatprep.subr.mxu0 0.0
    %127 = vmatpush1.msra.mxu0 0.0
    %128 = vmatprep.subr.mxu0 0.0
    %129 = vmatpush1.msra.mxu0 0.0
    %130 = vmatprep.subr.mxu0 0.0
    %131 = vmatpush1.msra.mxu0 0.0
    %132 = vmatprep.subr.mxu0 0.0
    %133 = vmatpush1.msra.mxu0 0.0
    %134 = vmatprep.subr.mxu0 0.0
    %135 = vmatpush1.msra.mxu0 0.0
    %136 = vmatprep.subr.mxu0 0.0
    %137 = vmatpush1.msra.mxu0 0.0
    %138 = vmatprep.subr.mxu0 0.0
    %139 = vmatpush1.msra.mxu0 0.0
    %140 = vmatprep.subr.mxu0 0.0
    %141 = vmatpush1.msra.mxu0 0.0
    %142 = vmatprep.subr.mxu0 0.0
    %143 = vmatpush1.msra.mxu0 0.0
    %144 = vmatprep.subr.mxu0 0.0
    %145 = vmatpush1.msra.mxu0 0.0
    %146 = vmatprep.subr.mxu0 0.0
    %147 = vmatpush1.msra.mxu0 0.0
    %148 = vmatprep.subr.mxu0 0.0
    %149 = vmatpush1.msra.mxu0 0.0
    %150 = vmatprep.subr.mxu0 0.0
    %151 = vmatpush1.msra.mxu0 0.0
    %152 = vmatprep.subr.mxu0 0.0
    %153 = vmatpush1.msra.mxu0 0.0
    %154 = vmatprep.subr.mxu0 0.0
    %155 = vmatpush1.msra.mxu0 0.0
    %156 = vmatprep.mubr.f32.mxu0 0.0
    %157 = vmatmul.mubr.f32.gmra.mrb[0].mxu0 %v90
    %v158 = vpop.f32.mrb[0].mxu0
    %v159 = vadd.f32 0.0, %v158
    %v160 = vpop.f32.mrb[0].mxu0
    %161 = vdwg.mxu0
    %vm162 = vcmp.gt.f32.partialorder %v159, 0.0
    %v163 = vmul.f32 %v159, 0.2
    %v164 = vsel %vm162, %v159, %v163
    %165 = vrot.lane.b32.xlu0 %v164, 1
    %v166 = vpop.permute.xlu0 %165
    %v167 = vmul.f32 %v166, %v73
    %168 = vst [vmem:[#allocation2] sm:$0xff] %v167
    %169 = vst [vmem:[#allocation2 + $0x8] sm:$0xff] %v164
    %170 = vrot.lane.b32.xlu0 %v164, 127
    %v171 = vpop.permute.xlu0 %170
    %v172 = vmul.f32 %v171, %v74
    %173 = vst [vmem:[#allocation2 + $0x10] sm:$0xff] %v172
    %s174 = scalar_lea.vmem [#allocation6], 8
    %v175 = vld [vmem:[%s174] sm:$0xff]
    %v176 = vld [vmem:[#allocation2] sm:$0xff]
    %v177 = vld [vmem:[#allocation2 + $0x8] sm:$0xff]
    %v178 = vld [vmem:[#allocation2 + $0x10] sm:$0xff]
    %v180 = vsel %vm88, %v175, 0
    %182 = vmatprep.subr.mxu0 0.0
    %183 = vmatpush1.msra.mxu0 %v176
    %184 = vmatprep.subr.mxu0 0.0
    %185 = vmatpush1.msra.mxu0 %v177
    %186 = vmatprep.subr.mxu0 0.0
    %187 = vmatpush1.msra.mxu0 %v178
    %188 = vmatprep.subr.mxu0 0.0
    %189 = vmatpush1.msra.mxu0 0.0
    %190 = vmatprep.subr.mxu0 0.0
    %191 = vmatpush1.msra.mxu0 0.0
    %192 = vmatprep.subr.mxu0 0.0
    %193 = vmatpush1.msra.mxu0 0.0
    %194 = vmatprep.subr.mxu0 0.0
    %195 = vmatpush1.msra.mxu0 0.0
    %196 = vmatprep.subr.mxu0 0.0
    %197 = vmatpush1.msra.mxu0 0.0
    %198 = vmatprep.subr.mxu0 0.0
    %199 = vmatpush1.msra.mxu0 0.0
    %200 = vmatprep.subr.mxu0 0.0
    %201 = vmatpush1.msra.mxu0 0.0
    %202 = vmatprep.subr.mxu0 0.0
    %203 = vmatpush1.msra.mxu0 0.0
    %204 = vmatprep.subr.mxu0 0.0
    %205 = vmatpush1.msra.mxu0 0.0
    %206 = vmatprep.subr.mxu0 0.0
    %207 = vmatpush1.msra.mxu0 0.0
    %208 = vmatprep.subr.mxu0 0.0
    %209 = vmatpush1.msra.mxu0 0.0
    %210 = vmatprep.subr.mxu0 0.0
    %211 = vmatpush1.msra.mxu0 0.0
    %212 = vmatprep.subr.mxu0 0.0
    %213 = vmatpush1.msra.mxu0 0.0
    %214 = vmatprep.subr.mxu0 0.0
    %215 = vmatpush1.msra.mxu0 0.0
    %216 = vmatprep.subr.mxu0 0.0
    %217 = vmatpush1.msra.mxu0 0.0
    %218 = vmatprep.subr.mxu0 0.0
    %219 = vmatpush1.msra.mxu0 0.0
    %220 = vmatprep.subr.mxu0 0.0
    %221 = vmatpush1.msra.mxu0 0.0
    %222 = vmatprep.subr.mxu0 0.0
    %223 = vmatpush1.msra.mxu0 0.0
    %224 = vmatprep.subr.mxu0 0.0
    %225 = vmatpush1.msra.mxu0 0.0
    %226 = vmatprep.subr.mxu0 0.0
    %227 = vmatpush1.msra.mxu0 0.0
    %228 = vmatprep.subr.mxu0 0.0
    %229 = vmatpush1.msra.mxu0 0.0
    %230 = vmatprep.subr.mxu0 0.0
    %231 = vmatpush1.msra.mxu0 0.0
    %232 = vmatprep.subr.mxu0 0.0
    %233 = vmatpush1.msra.mxu0 0.0
    %234 = vmatprep.subr.mxu0 0.0
    %235 = vmatpush1.msra.mxu0 0.0
    %236 = vmatprep.subr.mxu0 0.0
    %237 = vmatpush1.msra.mxu0 0.0
    %238 = vmatprep.subr.mxu0 0.0
    %239 = vmatpush1.msra.mxu0 0.0
    %240 = vmatprep.subr.mxu0 0.0
    %241 = vmatpush1.msra.mxu0 0.0
    %242 = vmatprep.subr.mxu0 0.0
    %243 = vmatpush1.msra.mxu0 0.0
    %244 = vmatprep.subr.mxu0 0.0
    %245 = vmatpush1.msra.mxu0 0.0
    %246 = vmatprep.mubr.f32.mxu0 0.0
    %247 = vmatmul.mubr.f32.gmra.mrb[0].mxu0 %v180
    %v248 = vpop.f32.mrb[0].mxu0
    %v249 = vadd.f32 0.0, %v248
    %v250 = vpop.f32.mrb[0].mxu0
    %251 = vdwg.mxu0
    %vm252 = vcmp.gt.f32.partialorder %v249, 0.0
    %v253 = vmul.f32 %v249, 0.2
    %v254 = vsel %vm252, %v249, %v253
    %255 = vrot.lane.b32.xlu0 %v254, 1
    %v256 = vpop.permute.xlu0 %255
    %v257 = vmul.f32 %v256, %v73
    %258 = vst [vmem:[#allocation2] sm:$0xff] %v257
    %259 = vst [vmem:[#allocation2 + $0x8] sm:$0xff] %v254
    %260 = vrot.lane.b32.xlu0 %v254, 127
    %v261 = vpop.permute.xlu0 %260
    %v262 = vmul.f32 %v261, %v74
    %263 = vst [vmem:[#allocation2 + $0x10] sm:$0xff] %v262
    %s264 = scalar_lea.vmem [#allocation6], 16
    %v265 = vld [vmem:[%s264] sm:$0xff]
    %v266 = vld [vmem:[#allocation2] sm:$0xff]
    %v267 = vld [vmem:[#allocation2 + $0x8] sm:$0xff]
    %v268 = vld [vmem:[#allocation2 + $0x10] sm:$0xff]
    %v270 = vsel %vm88, %v265, 0
    %272 = vmatprep.subr.mxu0 0.0
    %273 = vmatpush1.msra.mxu0 %v266
    %274 = vmatprep.subr.mxu0 0.0
    %275 = vmatpush1.msra.mxu0 %v267
    %276 = vmatprep.subr.mxu0 0.0
    %277 = vmatpush1.msra.mxu0 %v268
    %278 = vmatprep.subr.mxu0 0.0
    %279 = vmatpush1.msra.mxu0 0.0
    %280 = vmatprep.subr.mxu0 0.0
    %281 = vmatpush1.msra.mxu0 0.0
    %282 = vmatprep.subr.mxu0 0.0
    %283 = vmatpush1.msra.mxu0 0.0
    %284 = vmatprep.subr.mxu0 0.0
    %285 = vmatpush1.msra.mxu0 0.0
    %286 = vmatprep.subr.mxu0 0.0
    %287 = vmatpush1.msra.mxu0 0.0
    %288 = vmatprep.subr.mxu0 0.0
    %289 = vmatpush1.msra.mxu0 0.0
    %290 = vmatprep.subr.mxu0 0.0
    %291 = vmatpush1.msra.mxu0 0.0
    %292 = vmatprep.subr.mxu0 0.0
    %293 = vmatpush1.msra.mxu0 0.0
    %294 = vmatprep.subr.mxu0 0.0
    %295 = vmatpush1.msra.mxu0 0.0
    %296 = vmatprep.subr.mxu0 0.0
    %297 = vmatpush1.msra.mxu0 0.0
    %298 = vmatprep.subr.mxu0 0.0
    %299 = vmatpush1.msra.mxu0 0.0
    %300 = vmatprep.subr.mxu0 0.0
    %301 = vmatpush1.msra.mxu0 0.0
    %302 = vmatprep.subr.mxu0 0.0
    %303 = vmatpush1.msra.mxu0 0.0
    %304 = vmatprep.subr.mxu0 0.0
    %305 = vmatpush1.msra.mxu0 0.0
    %306 = vmatprep.subr.mxu0 0.0
    %307 = vmatpush1.msra.mxu0 0.0
    %308 = vmatprep.subr.mxu0 0.0
    %309 = vmatpush1.msra.mxu0 0.0
    %310 = vmatprep.subr.mxu0 0.0
    %311 = vmatpush1.msra.mxu0 0.0
    %312 = vmatprep.subr.mxu0 0.0
    %313 = vmatpush1.msra.mxu0 0.0
    %314 = vmatprep.subr.mxu0 0.0
    %315 = vmatpush1.msra.mxu0 0.0
    %316 = vmatprep.subr.mxu0 0.0
    %317 = vmatpush1.msra.mxu0 0.0
    %318 = vmatprep.subr.mxu0 0.0
    %319 = vmatpush1.msra.mxu0 0.0
    %320 = vmatprep.subr.mxu0 0.0
    %321 = vmatpush1.msra.mxu0 0.0
    %322 = vmatprep.subr.mxu0 0.0
    %323 = vmatpush1.msra.mxu0 0.0
    %324 = vmatprep.subr.mxu0 0.0
    %325 = vmatpush1.msra.mxu0 0.0
    %326 = vmatprep.subr.mxu0 0.0
    %327 = vmatpush1.msra.mxu0 0.0
    %328 = vmatprep.subr.mxu0 0.0
    %329 = vmatpush1.msra.mxu0 0.0
    %330 = vmatprep.subr.mxu0 0.0
    %331 = vmatpush1.msra.mxu0 0.0
    %332 = vmatprep.subr.mxu0 0.0
    %333 = vmatpush1.msra.mxu0 0.0
    %334 = vmatprep.subr.mxu0 0.0
    %335 = vmatpush1.msra.mxu0 0.0
    %336 = vmatprep.mubr.f32.mxu0 0.0
    %337 = vmatmul.mubr.f32.gmra.mrb[0].mxu0 %v270
    %v338 = vpop.f32.mrb[0].mxu0
    %v339 = vadd.f32 0.0, %v338
    %v340 = vpop.f32.mrb[0].mxu0
    %341 = vdwg.mxu0
    %vm342 = vcmp.gt.f32.partialorder %v339, 0.0
    %v343 = vmul.f32 %v339, 0.2
    %v344 = vsel %vm342, %v339, %v343
    %345 = vrot.lane.b32.xlu0 %v344, 1
    %v346 = vpop.permute.xlu0 %345
    %v347 = vmul.f32 %v346, %v73
    %348 = vst [vmem:[#allocation2] sm:$0xff] %v347
    %349 = vst [vmem:[#allocation2 + $0x8] sm:$0xff] %v344
    %350 = vrot.lane.b32.xlu0 %v344, 127
    %v351 = vpop.permute.xlu0 %350
    %v352 = vmul.f32 %v351, %v74
    %353 = vst [vmem:[#allocation2 + $0x10] sm:$0xff] %v352
    %s354 = scalar_lea.vmem [#allocation6], 24
    %v355 = vld [vmem:[%s354] sm:$0xff]
    %v356 = vld [vmem:[#allocation2] sm:$0xff]
    %v357 = vld [vmem:[#allocation2 + $0x8] sm:$0xff]
    %v358 = vld [vmem:[#allocation2 + $0x10] sm:$0xff]
    %v360 = vsel %vm88, %v355, 0
    %362 = vmatprep.subr.mxu0 0.0
    %363 = vmatpush1.msra.mxu0 %v356
    %364 = vmatprep.subr.mxu0 0.0
    %365 = vmatpush1.msra.mxu0 %v357
    %366 = vmatprep.subr.mxu0 0.0
    %367 = vmatpush1.msra.mxu0 %v358
    %368 = vmatprep.subr.mxu0 0.0
    %369 = vmatpush1.msra.mxu0 0.0
    %370 = vmatprep.subr.mxu0 0.0
    %371 = vmatpush1.msra.mxu0 0.0
    %372 = vmatprep.subr.mxu0 0.0
    %373 = vmatpush1.msra.mxu0 0.0
    %374 = vmatprep.subr.mxu0 0.0
    %375 = vmatpush1.msra.mxu0 0.0
    %376 = vmatprep.subr.mxu0 0.0
    %377 = vmatpush1.msra.mxu0 0.0
    %378 = vmatprep.subr.mxu0 0.0
    %379 = vmatpush1.msra.mxu0 0.0
    %380 = vmatprep.subr.mxu0 0.0
    %381 = vmatpush1.msra.mxu0 0.0
    %382 = vmatprep.subr.mxu0 0.0
    %383 = vmatpush1.msra.mxu0 0.0
    %384 = vmatprep.subr.mxu0 0.0
    %385 = vmatpush1.msra.mxu0 0.0
    %386 = vmatprep.subr.mxu0 0.0
    %387 = vmatpush1.msra.mxu0 0.0
    %388 = vmatprep.subr.mxu0 0.0
    %389 = vmatpush1.msra.mxu0 0.0
    %390 = vmatprep.subr.mxu0 0.0
    %391 = vmatpush1.msra.mxu0 0.0
    %392 = vmatprep.subr.mxu0 0.0
    %393 = vmatpush1.msra.mxu0 0.0
    %394 = vmatprep.subr.mxu0 0.0
    %395 = vmatpush1.msra.mxu0 0.0
    %396 = vmatprep.subr.mxu0 0.0
    %397 = vmatpush1.msra.mxu0 0.0
    %398 = vmatprep.subr.mxu0 0.0
    %399 = vmatpush1.msra.mxu0 0.0
    %400 = vmatprep.subr.mxu0 0.0
    %401 = vmatpush1.msra.mxu0 0.0
    %402 = vmatprep.subr.mxu0 0.0
    %403 = vmatpush1.msra.mxu0 0.0
    %404 = vmatprep.subr.mxu0 0.0
    %405 = vmatpush1.msra.mxu0 0.0
    %406 = vmatprep.subr.mxu0 0.0
    %407 = vmatpush1.msra.mxu0 0.0
    %408 = vmatprep.subr.mxu0 0.0
    %409 = vmatpush1.msra.mxu0 0.0
    %410 = vmatprep.subr.mxu0 0.0
    %411 = vmatpush1.msra.mxu0 0.0
    %412 = vmatprep.subr.mxu0 0.0
    %413 = vmatpush1.msra.mxu0 0.0
    %414 = vmatprep.subr.mxu0 0.0
    %415 = vmatpush1.msra.mxu0 0.0
    %416 = vmatprep.subr.mxu0 0.0
    %417 = vmatpush1.msra.mxu0 0.0
    %418 = vmatprep.subr.mxu0 0.0
    %419 = vmatpush1.msra.mxu0 0.0
    %420 = vmatprep.subr.mxu0 0.0
    %421 = vmatpush1.msra.mxu0 0.0
    %422 = vmatprep.subr.mxu0 0.0
    %423 = vmatpush1.msra.mxu0 0.0
    %424 = vmatprep.subr.mxu0 0.0
    %425 = vmatpush1.msra.mxu0 0.0
    %426 = vmatprep.mubr.f32.mxu0 0.0
    %427 = vmatmul.mubr.f32.gmra.mrb[0].mxu0 %v360
    %v428 = vpop.f32.mrb[0].mxu0
    %v429 = vadd.f32 0.0, %v428
    %v430 = vpop.f32.mrb[0].mxu0
    %431 = vdwg.mxu0
    %vm432 = vcmp.gt.f32.partialorder %v429, 0.0
    %v433 = vmul.f32 %v429, 0.2
    %v434 = vsel %vm432, %v429, %v433
    %435 = vrot.lane.b32.xlu0 %v434, 1
    %v436 = vpop.permute.xlu0 %435
    %v437 = vmul.f32 %v436, %v73
    %438 = vst [vmem:[#allocation2] sm:$0xff] %v437
    %439 = vst [vmem:[#allocation2 + $0x8] sm:$0xff] %v434
    %440 = vrot.lane.b32.xlu0 %v434, 127
    %v441 = vpop.permute.xlu0 %440
    %v442 = vmul.f32 %v441, %v74
    %443 = vst [vmem:[#allocation2 + $0x10] sm:$0xff] %v442
    %s444 = scalar_lea.vmem [#allocation6], 32
    %v445 = vld [vmem:[%s444] sm:$0xff]
    %v446 = vld [vmem:[#allocation2] sm:$0xff]
    %v447 = vld [vmem:[#allocation2 + $0x8] sm:$0xff]
    %v448 = vld [vmem:[#allocation2 + $0x10] sm:$0xff]
    %v450 = vsel %vm88, %v445, 0
    %452 = vmatprep.subr.mxu0 0.0
    %453 = vmatpush1.msra.mxu0 %v446
    %454 = vmatprep.subr.mxu0 0.0
    %455 = vmatpush1.msra.mxu0 %v447
    %456 = vmatprep.subr.mxu0 0.0
    %457 = vmatpush1.msra.mxu0 %v448
    %458 = vmatprep.subr.mxu0 0.0
    %459 = vmatpush1.msra.mxu0 0.0
    %460 = vmatprep.subr.mxu0 0.0
    %461 = vmatpush1.msra.mxu0 0.0
    %462 = vmatprep.subr.mxu0 0.0
    %463 = vmatpush1.msra.mxu0 0.0
    %464 = vmatprep.subr.mxu0 0.0
    %465 = vmatpush1.msra.mxu0 0.0
    %466 = vmatprep.subr.mxu0 0.0
    %467 = vmatpush1.msra.mxu0 0.0
    %468 = vmatprep.subr.mxu0 0.0
    %469 = vmatpush1.msra.mxu0 0.0
    %470 = vmatprep.subr.mxu0 0.0
    %471 = vmatpush1.msra.mxu0 0.0
    %472 = vmatprep.subr.mxu0 0.0
    %473 = vmatpush1.msra.mxu0 0.0
    %474 = vmatprep.subr.mxu0 0.0
    %475 = vmatpush1.msra.mxu0 0.0
    %476 = vmatprep.subr.mxu0 0.0
    %477 = vmatpush1.msra.mxu0 0.0
    %478 = vmatprep.subr.mxu0 0.0
    %479 = vmatpush1.msra.mxu0 0.0
    %480 = vmatprep.subr.mxu0 0.0
    %481 = vmatpush1.msra.mxu0 0.0
    %482 = vmatprep.subr.mxu0 0.0
    %483 = vmatpush1.msra.mxu0 0.0
    %484 = vmatprep.subr.mxu0 0.0
    %485 = vmatpush1.msra.mxu0 0.0
    %486 = vmatprep.subr.mxu0 0.0
    %487 = vmatpush1.msra.mxu0 0.0
    %488 = vmatprep.subr.mxu0 0.0
    %489 = vmatpush1.msra.mxu0 0.0
    %490 = vmatprep.subr.mxu0 0.0
    %491 = vmatpush1.msra.mxu0 0.0
    %492 = vmatprep.subr.mxu0 0.0
    %493 = vmatpush1.msra.mxu0 0.0
    %494 = vmatprep.subr.mxu0 0.0
    %495 = vmatpush1.msra.mxu0 0.0
    %496 = vmatprep.subr.mxu0 0.0
    %497 = vmatpush1.msra.mxu0 0.0
    %498 = vmatprep.subr.mxu0 0.0
    %499 = vmatpush1.msra.mxu0 0.0
    %500 = vmatprep.subr.mxu0 0.0
    %501 = vmatpush1.msra.mxu0 0.0
    %502 = vmatprep.subr.mxu0 0.0
    %503 = vmatpush1.msra.mxu0 0.0
    %504 = vmatprep.subr.mxu0 0.0
    %505 = vmatpush1.msra.mxu0 0.0
    %506 = vmatprep.subr.mxu0 0.0
    %507 = vmatpush1.msra.mxu0 0.0
    %508 = vmatprep.subr.mxu0 0.0
    %509 = vmatpush1.msra.mxu0 0.0
    %510 = vmatprep.subr.mxu0 0.0
    %511 = vmatpush1.msra.mxu0 0.0
    %512 = vmatprep.subr.mxu0 0.0
    %513 = vmatpush1.msra.mxu0 0.0
    %514 = vmatprep.subr.mxu0 0.0
    %515 = vmatpush1.msra.mxu0 0.0
    %516 = vmatprep.mubr.f32.mxu0 0.0
    %517 = vmatmul.mubr.f32.gmra.mrb[0].mxu0 %v450
    %v518 = vpop.f32.mrb[0].mxu0
    %v519 = vadd.f32 0.0, %v518
    %v520 = vpop.f32.mrb[0].mxu0
    %521 = vdwg.mxu0
    %vm522 = vcmp.gt.f32.partialorder %v519, 0.0
    %v523 = vmul.f32 %v519, 0.2
    %v524 = vsel %vm522, %v519, %v523
    %525 = vrot.lane.b32.xlu0 %v524, 1
    %v526 = vpop.permute.xlu0 %525
    %v527 = vmul.f32 %v526, %v73
    %528 = vst [vmem:[#allocation2] sm:$0xff] %v527
    %529 = vst [vmem:[#allocation2 + $0x8] sm:$0xff] %v524
    %530 = vrot.lane.b32.xlu0 %v524, 127
    %v531 = vpop.permute.xlu0 %530
    %v532 = vmul.f32 %v531, %v74
    %533 = vst [vmem:[#allocation2 + $0x10] sm:$0xff] %v532
    %s534 = scalar_lea.vmem [#allocation6], 40
    %v535 = vld [vmem:[%s534] sm:$0xff]
    %v536 = vld [vmem:[#allocation2] sm:$0xff]
    %v537 = vld [vmem:[#allocation2 + $0x8] sm:$0xff]
    %v538 = vld [vmem:[#allocation2 + $0x10] sm:$0xff]
    %v540 = vsel %vm88, %v535, 0
    %542 = vmatprep.subr.mxu0 0.0
    %543 = vmatpush1.msra.mxu0 %v536
    %544 = vmatprep.subr.mxu0 0.0
    %545 = vmatpush1.msra.mxu0 %v537
    %546 = vmatprep.subr.mxu0 0.0
    %547 = vmatpush1.msra.mxu0 %v538
    %548 = vmatprep.subr.mxu0 0.0
    %549 = vmatpush1.msra.mxu0 0.0
    %550 = vmatprep.subr.mxu0 0.0
    %551 = vmatpush1.msra.mxu0 0.0
    %552 = vmatprep.subr.mxu0 0.0
    %553 = vmatpush1.msra.mxu0 0.0
    %554 = vmatprep.subr.mxu0 0.0
    %555 = vmatpush1.msra.mxu0 0.0
    %556 = vmatprep.subr.mxu0 0.0
    %557 = vmatpush1.msra.mxu0 0.0
    %558 = vmatprep.subr.mxu0 0.0
    %559 = vmatpush1.msra.mxu0 0.0
    %560 = vmatprep.subr.mxu0 0.0
    %561 = vmatpush1.msra.mxu0 0.0
    %562 = vmatprep.subr.mxu0 0.0
    %563 = vmatpush1.msra.mxu0 0.0
    %564 = vmatprep.subr.mxu0 0.0
    %565 = vmatpush1.msra.mxu0 0.0
    %566 = vmatprep.subr.mxu0 0.0
    %567 = vmatpush1.msra.mxu0 0.0
    %568 = vmatprep.subr.mxu0 0.0
    %569 = vmatpush1.msra.mxu0 0.0
    %570 = vmatprep.subr.mxu0 0.0
    %571 = vmatpush1.msra.mxu0 0.0
    %572 = vmatprep.subr.mxu0 0.0
    %573 = vmatpush1.msra.mxu0 0.0
    %574 = vmatprep.subr.mxu0 0.0
    %575 = vmatpush1.msra.mxu0 0.0
    %576 = vmatprep.subr.mxu0 0.0
    %577 = vmatpush1.msra.mxu0 0.0
    %578 = vmatprep.subr.mxu0 0.0
    %579 = vmatpush1.msra.mxu0 0.0
    %580 = vmatprep.subr.mxu0 0.0
    %581 = vmatpush1.msra.mxu0 0.0
    %582 = vmatprep.subr.mxu0 0.0
    %583 = vmatpush1.msra.mxu0 0.0
    %584 = vmatprep.subr.mxu0 0.0
    %585 = vmatpush1.msra.mxu0 0.0
    %586 = vmatprep.subr.mxu0 0.0
    %587 = vmatpush1.msra.mxu0 0.0
    %588 = vmatprep.subr.mxu0 0.0
    %589 = vmatpush1.msra.mxu0 0.0
    %590 = vmatprep.subr.mxu0 0.0
    %591 = vmatpush1.msra.mxu0 0.0
    %592 = vmatprep.subr.mxu0 0.0
    %593 = vmatpush1.msra.mxu0 0.0
    %594 = vmatprep.subr.mxu0 0.0
    %595 = vmatpush1.msra.mxu0 0.0
    %596 = vmatprep.subr.mxu0 0.0
    %597 = vmatpush1.msra.mxu0 0.0
    %598 = vmatprep.subr.mxu0 0.0
    %599 = vmatpush1.msra.mxu0 0.0
    %600 = vmatprep.subr.mxu0 0.0
    %601 = vmatpush1.msra.mxu0 0.0
    %602 = vmatprep.subr.mxu0 0.0
    %603 = vmatpush1.msra.mxu0 0.0
    %604 = vmatprep.subr.mxu0 0.0
    %605 = vmatpush1.msra.mxu0 0.0
    %606 = vmatprep.mubr.f32.mxu0 0.0
    %607 = vmatmul.mubr.f32.gmra.mrb[0].mxu0 %v540
    %v608 = vpop.f32.mrb[0].mxu0
    %v609 = vadd.f32 0.0, %v608
    %v610 = vpop.f32.mrb[0].mxu0
    %611 = vdwg.mxu0
    %vm612 = vcmp.gt.f32.partialorder %v609, 0.0
    %v613 = vmul.f32 %v609, 0.2
    %v614 = vsel %vm612, %v609, %v613
    %615 = vrot.lane.b32.xlu0 %v614, 1
    %v616 = vpop.permute.xlu0 %615
    %v617 = vmul.f32 %v616, %v73
    %618 = vst [vmem:[#allocation2] sm:$0xff] %v617
    %619 = vst [vmem:[#allocation2 + $0x8] sm:$0xff] %v614
    %620 = vrot.lane.b32.xlu0 %v614, 127
    %v621 = vpop.permute.xlu0 %620
    %v622 = vmul.f32 %v621, %v74
    %623 = vst [vmem:[#allocation2 + $0x10] sm:$0xff] %v622
    %s624 = scalar_lea.vmem [#allocation6], 48
    %v625 = vld [vmem:[%s624] sm:$0xff]
    %v626 = vld [vmem:[#allocation2] sm:$0xff]
    %v627 = vld [vmem:[#allocation2 + $0x8] sm:$0xff]
    %v628 = vld [vmem:[#allocation2 + $0x10] sm:$0xff]
    %v630 = vsel %vm88, %v625, 0
    %632 = vmatprep.subr.mxu0 0.0
    %633 = vmatpush1.msra.mxu0 %v626
    %634 = vmatprep.subr.mxu0 0.0
    %635 = vmatpush1.msra.mxu0 %v627
    %636 = vmatprep.subr.mxu0 0.0
    %637 = vmatpush1.msra.mxu0 %v628
    %638 = vmatprep.subr.mxu0 0.0
    %639 = vmatpush1.msra.mxu0 0.0
    %640 = vmatprep.subr.mxu0 0.0
    %641 = vmatpush1.msra.mxu0 0.0
    %642 = vmatprep.subr.mxu0 0.0
    %643 = vmatpush1.msra.mxu0 0.0
    %644 = vmatprep.subr.mxu0 0.0
    %645 = vmatpush1.msra.mxu0 0.0
    %646 = vmatprep.subr.mxu0 0.0
    %647 = vmatpush1.msra.mxu0 0.0
    %648 = vmatprep.subr.mxu0 0.0
    %649 = vmatpush1.msra.mxu0 0.0
    %650 = vmatprep.subr.mxu0 0.0
    %651 = vmatpush1.msra.mxu0 0.0
    %652 = vmatprep.subr.mxu0 0.0
    %653 = vmatpush1.msra.mxu0 0.0
    %654 = vmatprep.subr.mxu0 0.0
    %655 = vmatpush1.msra.mxu0 0.0
    %656 = vmatprep.subr.mxu0 0.0
    %657 = vmatpush1.msra.mxu0 0.0
    %658 = vmatprep.subr.mxu0 0.0
    %659 = vmatpush1.msra.mxu0 0.0
    %660 = vmatprep.subr.mxu0 0.0
    %661 = vmatpush1.msra.mxu0 0.0
    %662 = vmatprep.subr.mxu0 0.0
    %663 = vmatpush1.msra.mxu0 0.0
    %664 = vmatprep.subr.mxu0 0.0
    %665 = vmatpush1.msra.mxu0 0.0
    %666 = vmatprep.subr.mxu0 0.0
    %667 = vmatpush1.msra.mxu0 0.0
    %668 = vmatprep.subr.mxu0 0.0
    %669 = vmatpush1.msra.mxu0 0.0
    %670 = vmatprep.subr.mxu0 0.0
    %671 = vmatpush1.msra.mxu0 0.0
    %672 = vmatprep.subr.mxu0 0.0
    %673 = vmatpush1.msra.mxu0 0.0
    %674 = vmatprep.subr.mxu0 0.0
    %675 = vmatpush1.msra.mxu0 0.0
    %676 = vmatprep.subr.mxu0 0.0
    %677 = vmatpush1.msra.mxu0 0.0
    %678 = vmatprep.subr.mxu0 0.0
    %679 = vmatpush1.msra.mxu0 0.0
    %680 = vmatprep.subr.mxu0 0.0
    %681 = vmatpush1.msra.mxu0 0.0
    %682 = vmatprep.subr.mxu0 0.0
    %683 = vmatpush1.msra.mxu0 0.0
    %684 = vmatprep.subr.mxu0 0.0
    %685 = vmatpush1.msra.mxu0 0.0
    %686 = vmatprep.subr.mxu0 0.0
    %687 = vmatpush1.msra.mxu0 0.0
    %688 = vmatprep.subr.mxu0 0.0
    %689 = vmatpush1.msra.mxu0 0.0
    %690 = vmatprep.subr.mxu0 0.0
    %691 = vmatpush1.msra.mxu0 0.0
    %692 = vmatprep.subr.mxu0 0.0
    %693 = vmatpush1.msra.mxu0 0.0
    %694 = vmatprep.subr.mxu0 0.0
    %695 = vmatpush1.msra.mxu0 0.0
    %696 = vmatprep.mubr.f32.mxu0 0.0
    %697 = vmatmul.mubr.f32.gmra.mrb[0].mxu0 %v630
    %v698 = vpop.f32.mrb[0].mxu0
    %v699 = vadd.f32 0.0, %v698
    %v700 = vpop.f32.mrb[0].mxu0
    %701 = vdwg.mxu0
    %vm702 = vcmp.gt.f32.partialorder %v699, 0.0
    %v703 = vmul.f32 %v699, 0.2
    %v704 = vsel %vm702, %v699, %v703
    %705 = vrot.lane.b32.xlu0 %v704, 1
    %v706 = vpop.permute.xlu0 %705
    %v707 = vmul.f32 %v706, %v73
    %708 = vst [vmem:[#allocation2] sm:$0xff] %v707
    %709 = vst [vmem:[#allocation2 + $0x8] sm:$0xff] %v704
    %710 = vrot.lane.b32.xlu0 %v704, 127
    %v711 = vpop.permute.xlu0 %710
    %v712 = vmul.f32 %v711, %v74
    %713 = vst [vmem:[#allocation2 + $0x10] sm:$0xff] %v712
    %s714 = scalar_lea.vmem [#allocation6], 56
    %v715 = vld [vmem:[%s714] sm:$0xff]
    %v716 = vld [vmem:[#allocation2] sm:$0xff]
    %v717 = vld [vmem:[#allocation2 + $0x8] sm:$0xff]
    %v718 = vld [vmem:[#allocation2 + $0x10] sm:$0xff]
    %v720 = vsel %vm88, %v715, 0
    %722 = vmatprep.subr.mxu0 0.0
    %723 = vmatpush1.msra.mxu0 %v716
    %724 = vmatprep.subr.mxu0 0.0
    %725 = vmatpush1.msra.mxu0 %v717
    %726 = vmatprep.subr.mxu0 0.0
    %727 = vmatpush1.msra.mxu0 %v718
    %728 = vmatprep.subr.mxu0 0.0
    %729 = vmatpush1.msra.mxu0 0.0
    %730 = vmatprep.subr.mxu0 0.0
    %731 = vmatpush1.msra.mxu0 0.0
    %732 = vmatprep.subr.mxu0 0.0
    %733 = vmatpush1.msra.mxu0 0.0
    %734 = vmatprep.subr.mxu0 0.0
    %735 = vmatpush1.msra.mxu0 0.0
    %736 = vmatprep.subr.mxu0 0.0
    %737 = vmatpush1.msra.mxu0 0.0
    %738 = vmatprep.subr.mxu0 0.0
    %739 = vmatpush1.msra.mxu0 0.0
    %740 = vmatprep.subr.mxu0 0.0
    %741 = vmatpush1.msra.mxu0 0.0
    %742 = vmatprep.subr.mxu0 0.0
    %743 = vmatpush1.msra.mxu0 0.0
    %744 = vmatprep.subr.mxu0 0.0
    %745 = vmatpush1.msra.mxu0 0.0
    %746 = vmatprep.subr.mxu0 0.0
    %747 = vmatpush1.msra.mxu0 0.0
    %748 = vmatprep.subr.mxu0 0.0
    %749 = vmatpush1.msra.mxu0 0.0
    %750 = vmatprep.subr.mxu0 0.0
    %751 = vmatpush1.msra.mxu0 0.0
    %752 = vmatprep.subr.mxu0 0.0
    %753 = vmatpush1.msra.mxu0 0.0
    %754 = vmatprep.subr.mxu0 0.0
    %755 = vmatpush1.msra.mxu0 0.0
    %756 = vmatprep.subr.mxu0 0.0
    %757 = vmatpush1.msra.mxu0 0.0
    %758 = vmatprep.subr.mxu0 0.0
    %759 = vmatpush1.msra.mxu0 0.0
    %760 = vmatprep.subr.mxu0 0.0
    %761 = vmatpush1.msra.mxu0 0.0
    %762 = vmatprep.subr.mxu0 0.0
    %763 = vmatpush1.msra.mxu0 0.0
    %764 = vmatprep.subr.mxu0 0.0
    %765 = vmatpush1.msra.mxu0 0.0
    %766 = vmatprep.subr.mxu0 0.0
    %767 = vmatpush1.msra.mxu0 0.0
    %768 = vmatprep.subr.mxu0 0.0
    %769 = vmatpush1.msra.mxu0 0.0
    %770 = vmatprep.subr.mxu0 0.0
    %771 = vmatpush1.msra.mxu0 0.0
    %772 = vmatprep.subr.mxu0 0.0
    %773 = vmatpush1.msra.mxu0 0.0
    %774 = vmatprep.subr.mxu0 0.0
    %775 = vmatpush1.msra.mxu0 0.0
    %776 = vmatprep.subr.mxu0 0.0
    %777 = vmatpush1.msra.mxu0 0.0
    %778 = vmatprep.subr.mxu0 0.0
    %779 = vmatpush1.msra.mxu0 0.0
    %780 = vmatprep.subr.mxu0 0.0
    %781 = vmatpush1.msra.mxu0 0.0
    %782 = vmatprep.subr.mxu0 0.0
    %783 = vmatpush1.msra.mxu0 0.0
    %784 = vmatprep.subr.mxu0 0.0
    %785 = vmatpush1.msra.mxu0 0.0
    %786 = vmatprep.mubr.f32.mxu0 0.0
    %787 = vmatmul.mubr.f32.gmra.mrb[0].mxu0 %v720
    %v788 = vpop.f32.mrb[0].mxu0
    %v789 = vadd.f32 0.0, %v788
    %v790 = vpop.f32.mrb[0].mxu0
    %791 = vdwg.mxu0
    %vm792 = vcmp.gt.f32.partialorder %v789, 0.0
    %v793 = vmul.f32 %v789, 0.2
    %v794 = vsel %vm792, %v789, %v793
    %795 = vrot.lane.b32.xlu0 %v794, 1
    %v796 = vpop.permute.xlu0 %795
    %v797 = vmul.f32 %v796, %v73
    %798 = vst [vmem:[#allocation2] sm:$0xff] %v797
    %799 = vst [vmem:[#allocation2 + $0x8] sm:$0xff] %v794
    %800 = vrot.lane.b32.xlu0 %v794, 127
    %v801 = vpop.permute.xlu0 %800
    %v802 = vmul.f32 %v801, %v74
    %803 = vst [vmem:[#allocation2 + $0x10] sm:$0xff] %v802
    %s804 = scalar_lea.vmem [#allocation6], 64
    %v805 = vld [vmem:[%s804] sm:$0xff]
    %v806 = vld [vmem:[#allocation2] sm:$0xff]
    %v807 = vld [vmem:[#allocation2 + $0x8] sm:$0xff]
    %v808 = vld [vmem:[#allocation2 + $0x10] sm:$0xff]
    %v810 = vsel %vm88, %v805, 0
    %812 = vmatprep.subr.mxu0 0.0
    %813 = vmatpush1.msra.mxu0 %v806
    %814 = vmatprep.subr.mxu0 0.0
    %815 = vmatpush1.msra.mxu0 %v807
    %816 = vmatprep.subr.mxu0 0.0
    %817 = vmatpush1.msra.mxu0 %v808
    %818 = vmatprep.subr.mxu0 0.0
    %819 = vmatpush1.msra.mxu0 0.0
    %820 = vmatprep.subr.mxu0 0.0
    %821 = vmatpush1.msra.mxu0 0.0
    %822 = vmatprep.subr.mxu0 0.0
    %823 = vmatpush1.msra.mxu0 0.0
    %824 = vmatprep.subr.mxu0 0.0
    %825 = vmatpush1.msra.mxu0 0.0
    %826 = vmatprep.subr.mxu0 0.0
    %827 = vmatpush1.msra.mxu0 0.0
    %828 = vmatprep.subr.mxu0 0.0
    %829 = vmatpush1.msra.mxu0 0.0
    %830 = vmatprep.subr.mxu0 0.0
    %831 = vmatpush1.msra.mxu0 0.0
    %832 = vmatprep.subr.mxu0 0.0
    %833 = vmatpush1.msra.mxu0 0.0
    %834 = vmatprep.subr.mxu0 0.0
    %835 = vmatpush1.msra.mxu0 0.0
    %836 = vmatprep.subr.mxu0 0.0
    %837 = vmatpush1.msra.mxu0 0.0
    %838 = vmatprep.subr.mxu0 0.0
    %839 = vmatpush1.msra.mxu0 0.0
    %840 = vmatprep.subr.mxu0 0.0
    %841 = vmatpush1.msra.mxu0 0.0
    %842 = vmatprep.subr.mxu0 0.0
    %843 = vmatpush1.msra.mxu0 0.0
    %844 = vmatprep.subr.mxu0 0.0
    %845 = vmatpush1.msra.mxu0 0.0
    %846 = vmatprep.subr.mxu0 0.0
    %847 = vmatpush1.msra.mxu0 0.0
    %848 = vmatprep.subr.mxu0 0.0
    %849 = vmatpush1.msra.mxu0 0.0
    %850 = vmatprep.subr.mxu0 0.0
    %851 = vmatpush1.msra.mxu0 0.0
    %852 = vmatprep.subr.mxu0 0.0
    %853 = vmatpush1.msra.mxu0 0.0
    %854 = vmatprep.subr.mxu0 0.0
    %855 = vmatpush1.msra.mxu0 0.0
    %856 = vmatprep.subr.mxu0 0.0
    %857 = vmatpush1.msra.mxu0 0.0
    %858 = vmatprep.subr.mxu0 0.0
    %859 = vmatpush1.msra.mxu0 0.0
    %860 = vmatprep.subr.mxu0 0.0
    %861 = vmatpush1.msra.mxu0 0.0
    %862 = vmatprep.subr.mxu0 0.0
    %863 = vmatpush1.msra.mxu0 0.0
    %864 = vmatprep.subr.mxu0 0.0
    %865 = vmatpush1.msra.mxu0 0.0
    %866 = vmatprep.subr.mxu0 0.0
    %867 = vmatpush1.msra.mxu0 0.0
    %868 = vmatprep.subr.mxu0 0.0
    %869 = vmatpush1.msra.mxu0 0.0
    %870 = vmatprep.subr.mxu0 0.0
    %871 = vmatpush1.msra.mxu0 0.0
    %872 = vmatprep.subr.mxu0 0.0
    %873 = vmatpush1.msra.mxu0 0.0
    %874 = vmatprep.subr.mxu0 0.0
    %875 = vmatpush1.msra.mxu0 0.0
    %876 = vmatprep.mubr.f32.mxu0 0.0
    %877 = vmatmul.mubr.f32.gmra.mrb[0].mxu0 %v810
    %v878 = vpop.f32.mrb[0].mxu0
    %v879 = vadd.f32 0.0, %v878
    %v880 = vpop.f32.mrb[0].mxu0
    %881 = vdwg.mxu0
    %vm882 = vcmp.gt.f32.partialorder %v879, 0.0
    %v883 = vmul.f32 %v879, 0.2
    %v884 = vsel %vm882, %v879, %v883
    %885 = vrot.lane.b32.xlu0 %v884, 1
    %v886 = vpop.permute.xlu0 %885
    %v887 = vmul.f32 %v886, %v73
    %888 = vst [vmem:[#allocation2] sm:$0xff] %v887
    %889 = vst [vmem:[#allocation2 + $0x8] sm:$0xff] %v884
    %890 = vrot.lane.b32.xlu0 %v884, 127
    %v891 = vpop.permute.xlu0 %890
    %v892 = vmul.f32 %v891, %v74
    %893 = vst [vmem:[#allocation2 + $0x10] sm:$0xff] %v892
    %s894 = scalar_lea.vmem [#allocation6], 72
    %v895 = vld [vmem:[%s894] sm:$0xff]
    %v896 = vld [vmem:[#allocation2] sm:$0xff]
    %v897 = vld [vmem:[#allocation2 + $0x8] sm:$0xff]
    %v898 = vld [vmem:[#allocation2 + $0x10] sm:$0xff]
    %v900 = vsel %vm88, %v895, 0
    %902 = vmatprep.subr.mxu0 0.0
    %903 = vmatpush1.msra.mxu0 %v896
    %904 = vmatprep.subr.mxu0 0.0
    %905 = vmatpush1.msra.mxu0 %v897
    %906 = vmatprep.subr.mxu0 0.0
    %907 = vmatpush1.msra.mxu0 %v898
    %908 = vmatprep.subr.mxu0 0.0
    %909 = vmatpush1.msra.mxu0 0.0
    %910 = vmatprep.subr.mxu0 0.0
    %911 = vmatpush1.msra.mxu0 0.0
    %912 = vmatprep.subr.mxu0 0.0
    %913 = vmatpush1.msra.mxu0 0.0
    %914 = vmatprep.subr.mxu0 0.0
    %915 = vmatpush1.msra.mxu0 0.0
    %916 = vmatprep.subr.mxu0 0.0
    %917 = vmatpush1.msra.mxu0 0.0
    %918 = vmatprep.subr.mxu0 0.0
    %919 = vmatpush1.msra.mxu0 0.0
    %920 = vmatprep.subr.mxu0 0.0
    %921 = vmatpush1.msra.mxu0 0.0
    %922 = vmatprep.subr.mxu0 0.0
    %923 = vmatpush1.msra.mxu0 0.0
    %924 = vmatprep.subr.mxu0 0.0
    %925 = vmatpush1.msra.mxu0 0.0
    %926 = vmatprep.subr.mxu0 0.0
    %927 = vmatpush1.msra.mxu0 0.0
    %928 = vmatprep.subr.mxu0 0.0
    %929 = vmatpush1.msra.mxu0 0.0
    %930 = vmatprep.subr.mxu0 0.0
    %931 = vmatpush1.msra.mxu0 0.0
    %932 = vmatprep.subr.mxu0 0.0
    %933 = vmatpush1.msra.mxu0 0.0
    %934 = vmatprep.subr.mxu0 0.0
    %935 = vmatpush1.msra.mxu0 0.0
    %936 = vmatprep.subr.mxu0 0.0
    %937 = vmatpush1.msra.mxu0 0.0
    %938 = vmatprep.subr.mxu0 0.0
    %939 = vmatpush1.msra.mxu0 0.0
    %940 = vmatprep.subr.mxu0 0.0
    %941 = vmatpush1.msra.mxu0 0.0
    %942 = vmatprep.subr.mxu0 0.0
    %943 = vmatpush1.msra.mxu0 0.0
    %944 = vmatprep.subr.mxu0 0.0
    %945 = vmatpush1.msra.mxu0 0.0
    %946 = vmatprep.subr.mxu0 0.0
    %947 = vmatpush1.msra.mxu0 0.0
    %948 = vmatprep.subr.mxu0 0.0
    %949 = vmatpush1.msra.mxu0 0.0
    %950 = vmatprep.subr.mxu0 0.0
    %951 = vmatpush1.msra.mxu0 0.0
    %952 = vmatprep.subr.mxu0 0.0
    %953 = vmatpush1.msra.mxu0 0.0
    %954 = vmatprep.subr.mxu0 0.0
    %955 = vmatpush1.msra.mxu0 0.0
    %956 = vmatprep.subr.mxu0 0.0
    %957 = vmatpush1.msra.mxu0 0.0
    %958 = vmatprep.subr.mxu0 0.0
    %959 = vmatpush1.msra.mxu0 0.0
    %960 = vmatprep.subr.mxu0 0.0
    %961 = vmatpush1.msra.mxu0 0.0
    %962 = vmatprep.subr.mxu0 0.0
    %963 = vmatpush1.msra.mxu0 0.0
    %964 = vmatprep.subr.mxu0 0.0
    %965 = vmatpush1.msra.mxu0 0.0
    %966 = vmatprep.mubr.f32.mxu0 0.0
    %967 = vmatmul.mubr.f32.gmra.mrb[0].mxu0 %v900
    %v968 = vpop.f32.mrb[0].mxu0
    %v969 = vadd.f32 0.0, %v968
    %v970 = vpop.f32.mrb[0].mxu0
    %971 = vdwg.mxu0
    %vm972 = vcmp.gt.f32.partialorder %v969, 0.0
    %v973 = vmul.f32 %v969, 0.2
    %v974 = vsel %vm972, %v969, %v973
    %975 = vrot.lane.b32.xlu0 %v974, 1
    %v976 = vpop.permute.xlu0 %975
    %v977 = vmul.f32 %v976, %v73
    %978 = vst [vmem:[#allocation2] sm:$0xff] %v977
    %979 = vst [vmem:[#allocation2 + $0x8] sm:$0xff] %v974
    %980 = vrot.lane.b32.xlu0 %v974, 127
    %v981 = vpop.permute.xlu0 %980
    %v982 = vmul.f32 %v981, %v74
    %983 = vst [vmem:[#allocation2 + $0x10] sm:$0xff] %v982
    %v984 = vld [vmem:[#allocation8] sm:$0xff]
    %v985 = vld [vmem:[#allocation8 + $0x8] sm:$0xff]
    %v986 = vld [vmem:[#allocation2] sm:$0xff]
    %v987 = vld [vmem:[#allocation2 + $0x8] sm:$0xff]
    %v988 = vld [vmem:[#allocation2 + $0x10] sm:$0xff]
    %v990 = vsel %vm88, %v984, 0
    %v993 = vsel %vm88, %v985, 0
    %995 = vmatprep.subr.mxu0 0.0
    %996 = vmatpush1.msra.mxu0 %v986
    %997 = vmatprep.subr.mxu0 0.0
    %998 = vmatpush1.msra.mxu0 %v987
    %999 = vmatprep.subr.mxu0 0.0
    %1000 = vmatpush1.msra.mxu0 %v988
    %1001 = vmatprep.subr.mxu0 0.0
    %1002 = vmatpush1.msra.mxu0 0.0
    %1003 = vmatprep.subr.mxu0 0.0
    %1004 = vmatpush1.msra.mxu0 0.0
    %1005 = vmatprep.subr.mxu0 0.0
    %1006 = vmatpush1.msra.mxu0 0.0
    %1007 = vmatprep.subr.mxu0 0.0
    %1008 = vmatpush1.msra.mxu0 0.0
    %1009 = vmatprep.subr.mxu0 0.0
    %1010 = vmatpush1.msra.mxu0 0.0
    %1011 = vmatprep.subr.mxu0 0.0
    %1012 = vmatpush1.msra.mxu0 0.0
    %1013 = vmatprep.subr.mxu0 0.0
    %1014 = vmatpush1.msra.mxu0 0.0
    %1015 = vmatprep.subr.mxu0 0.0
    %1016 = vmatpush1.msra.mxu0 0.0
    %1017 = vmatprep.subr.mxu0 0.0
    %1018 = vmatpush1.msra.mxu0 0.0
    %1019 = vmatprep.subr.mxu0 0.0
    %1020 = vmatpush1.msra.mxu0 0.0
    %1021 = vmatprep.subr.mxu0 0.0
    %1022 = vmatpush1.msra.mxu0 0.0
    %1023 = vmatprep.subr.mxu0 0.0
    %1024 = vmatpush1.msra.mxu0 0.0
    %1025 = vmatprep.subr.mxu0 0.0
    %1026 = vmatpush1.msra.mxu0 0.0
    %1027 = vmatprep.subr.mxu0 0.0
    %1028 = vmatpush1.msra.mxu0 0.0
    %1029 = vmatprep.subr.mxu0 0.0
    %1030 = vmatpush1.msra.mxu0 0.0
    %1031 = vmatprep.subr.mxu0 0.0
    %1032 = vmatpush1.msra.mxu0 0.0
    %1033 = vmatprep.subr.mxu0 0.0
    %1034 = vmatpush1.msra.mxu0 0.0
    %1035 = vmatprep.subr.mxu0 0.0
    %1036 = vmatpush1.msra.mxu0 0.0
    %1037 = vmatprep.subr.mxu0 0.0
    %1038 = vmatpush1.msra.mxu0 0.0
    %1039 = vmatprep.subr.mxu0 0.0
    %1040 = vmatpush1.msra.mxu0 0.0
    %1041 = vmatprep.subr.mxu0 0.0
    %1042 = vmatpush1.msra.mxu0 0.0
    %1043 = vmatprep.subr.mxu0 0.0
    %1044 = vmatpush1.msra.mxu0 0.0
    %1045 = vmatprep.subr.mxu0 0.0
    %1046 = vmatpush1.msra.mxu0 0.0
    %1047 = vmatprep.subr.mxu0 0.0
    %1048 = vmatpush1.msra.mxu0 0.0
    %1049 = vmatprep.subr.mxu0 0.0
    %1050 = vmatpush1.msra.mxu0 0.0
    %1051 = vmatprep.subr.mxu0 0.0
    %1052 = vmatpush1.msra.mxu0 0.0
    %1053 = vmatprep.subr.mxu0 0.0
    %1054 = vmatpush1.msra.mxu0 0.0
    %1055 = vmatprep.subr.mxu0 0.0
    %1056 = vmatpush1.msra.mxu0 0.0
    %1057 = vmatprep.subr.mxu0 0.0
    %1058 = vmatpush1.msra.mxu0 0.0
    %1059 = vmatprep.mubr.f32.mxu0 0.0
    %1060 = vmatmul.mubr.f32.gmra.mrb[0].mxu0 %v990
    %v1061 = vpop.f32.mrb[0].mxu0
    %v1062 = vadd.f32 0.0, %v1061
    %v1063 = vpop.f32.mrb[0].mxu0
    %1064 = vmatprep.mubr.f32.mxu0 0.0
    %1065 = vmatmul.mubr.f32.gmra.mrb[0].mxu0 %v993
    %v1066 = vpop.f32.mrb[0].mxu0
    %v1067 = vadd.f32 0.0, %v1066
    %v1068 = vpop.f32.mrb[0].mxu0
    %1069 = vdwg.mxu0
    %vm1070 = vcmp.gt.f32.partialorder %v1062, 0.0
    %vm1071 = vcmp.gt.f32.partialorder %v1067, 0.0
    %v1072 = vmul.f32 %v1062, 0.2
    %v1073 = vmul.f32 %v1067, 0.2
    %v1074 = vsel %vm1070, %v1062, %v1072
    %v1075 = vsel %vm1071, %v1067, %v1073
    %1076 = vst [vmem:[#allocation11] sm:$0xff] %v1074
    %1077 = vst [vmem:[#allocation11 + $0x8] sm:$0xff] %v1075
    // Predicated region
    $region38: #{tpu_custom_call.1} parent=1 // pred_check
      _
    $region39: #{tpu_custom_call.1} parent=1 // pred_check_branch
      %1079 = sbr.rel (0) target = $region41
    $region40: #{tpu_custom_call.1} parent=1 // pred_region
      %s1081 = ssub.s32 256, 256
      %1082 = vsyncadd [#allocation5], %s1081
      %s1083 = sshll.u32 [#allocation11], 4
      %s1084 = int_to_ptr.vmem [resolvable:$true] %s1083
      %1089 = dma.vmem_to_hbm [thread:$0]  %s1084, 256, %s5, [#allocation5], 128, 128, 8
    $region41: #{tpu_custom_call.1} parent=1 // pred_fallthru
      _
    // Predicated region
    $region42: #{tpu_custom_call.1} parent=1 // pred_check
      _
    $region43: #{tpu_custom_call.1} parent=1 // pred_check_branch
      %1091 = sbr.rel (0) target = $region45
    $region44: #{tpu_custom_call.1} parent=1 // pred_region
      %1092 = dma.done [#allocation5], 256
    $region45: #{tpu_custom_call.1} parent=1 // pred_fallthru
      _
    %1093 = vsyncpa [#allocation4], 1
    %1094 = vsyncpa [#allocation7], 1
    %1095 = vsyncpa [#allocation10], 1
    %1096 = vsyncpa [#allocation5], 1

</llo_original>
